<compile_context>
chip_gen: v6e
topology: v6e:2x2x1
jax: 0.10.0
libtpu: 0.0.40
codegen_flags: <defaults>
</compile_context>

<pallas_src>
import functools

import jax
import jax.numpy as jnp
from jax.experimental import pallas as pl
from jax.experimental.pallas import tpu as pltpu


def _round_up(v, m):
    return ((v + m - 1) // m) * m


def _conv_maxpool_kernel(x_ref, m_ref, w_ref, b_ref, o_ref, *, Bb, T_cmp, D, OD):
    """One grid step == Bb batch elements.

    x_ref : VMEM (Bb, T_pad, D)       time-padded inputs (bf16/f32)
    m_ref : VMEM (Bb*T_cmp, 1) f32    per-row validity mask (t < x_l[b], b < B)
    w_ref : VMEM (4, D, OD)           conv taps (w_ref[j] = weights of tap j)
    b_ref : VMEM (1, OD) f32          combined bias
    o_ref : VMEM (Bb, OD) f32         max-over-time output rows
    """
    M = Bb * T_cmp

    # Four conv taps as four accumulating MXU contractions (f32 accumulator).
    # Tap j reads rows [j, j + T_cmp) of every batch element: always in bounds
    # because the wrapper pads time to T_pad = T_cmp + align (>= T_cmp + 8).
    tap0 = x_ref[:, pl.ds(0, T_cmp), :].reshape(M, D)
    acc = jnp.dot(tap0, w_ref[0], preferred_element_type=jnp.float32)
    for j in range(1, 4):
        tap = x_ref[:, pl.ds(j, T_cmp), :].reshape(M, D)
        acc = acc + jnp.dot(tap, w_ref[j], preferred_element_type=jnp.float32)

    # Epilogue in f32 (v5e-friendly): bias + ReLU, then zero out invalid rows.
    # ReLU guarantees acc >= 0 and x_l >= 1, so a {0,1} multiplicative mask is
    # equivalent to a -inf mask before the max.
    acc = jnp.maximum(acc + b_ref[...], 0.0)
    acc = acc * m_ref[...]

    # Vectorized max_along_time: (Bb*T_cmp, OD) -> (Bb, T_cmp, OD) -> (Bb, OD).
    o_ref[...] = jnp.max(acc.reshape(Bb, T_cmp, OD), axis=1).astype(o_ref.dtype)


def conv1d_forward(x, x_l, W, bias, *, block_b=None, matmul_dtype=jnp.bfloat16):
    """x: (B, T, n_dim) f32, x_l: (B,) int (1 <= x_l <= T), W: (4, n_dim, OD), bias: (1, OD)."""
    B, T, D = x.shape
    OD = W.shape[-1]

    itemsize = jnp.dtype(matmul_dtype).itemsize
    align = 32 // itemsize                 # sublane packing: 8 for f32, 16 for bf16
    T_cmp = _round_up(max(T, 1), align)    # compute rows per batch element
    T_pad = T_cmp + align                  # input rows per element (zero tail for taps 1..3)

    # Batch block: target >= 512 MXU rows per grid step, but don't over-pad tiny batches.
    if block_b is None:
        block_b = _round_up(pl.cdiv(512, T_cmp), 8)
    Bb = max(8, _round_up(min(block_b, _round_up(B, 8)), 8))
    B_pad = _round_up(B, Bb)

    # Wrapper-side zero padding of batch and time (replaces the in-kernel staging copy).
    x_p = jnp.zeros((B_pad, T_pad, D), matmul_dtype)
    x_p = x_p.at[:B, :T, :].set(x.astype(matmul_dtype))

    # Per-row validity mask (t < x_l[b] and b < B), precomputed once in HBM (tiny vs x).
    xl_pad = jnp.zeros((B_pad,), jnp.int32).at[:B].set(x_l.astype(jnp.int32))
    mask = (jnp.arange(T_cmp, dtype=jnp.int32)[None, :] < xl_pad[:, None])
    mask = mask.astype(jnp.float32).reshape(B_pad * T_cmp, 1)

    w_in = W.astype(matmul_dtype)          # bf16 matmul operands, f32 accumulation
    b_in = bias.astype(jnp.float32)

    kernel = functools.partial(_conv_maxpool_kernel, Bb=Bb, T_cmp=T_cmp, D=D, OD=OD)

    # Explicit VMEM budget with headroom (v7x: 64 MiB physical / 32 MiB scoped default).
    x_blk = Bb * T_pad * D * itemsize
    m_blk = Bb * T_cmp * 4
    o_blk = Bb * OD * 4
    w_bytes = 4 * D * OD * itemsize + OD * 4
    temps = 2 * Bb * T_cmp * (OD * 4 + D * 4)
    vmem_limit = int(min(max(2 * (2 * (x_blk + m_blk + o_blk) + 2 * w_bytes + temps),
                             16 << 20), 64 << 20))

    def run(single_buffer_consts):
        if single_buffer_consts:
            # Grid-invariant operands: single-buffer (no refetch, halves their VMEM).
            w_spec = pl.BlockSpec((4, D, OD), lambda i: (0, 0, 0),
                                  pipeline_mode=pl.Buffered(1))
            b_spec = pl.BlockSpec((1, OD), lambda i: (0, 0),
                                  pipeline_mode=pl.Buffered(1))
        else:
            w_spec = pl.BlockSpec((4, D, OD), lambda i: (0, 0, 0))
            b_spec = pl.BlockSpec((1, OD), lambda i: (0, 0))
        out = pl.pallas_call(
            kernel,
            out_shape=jax.ShapeDtypeStruct((B_pad, OD), jnp.float32),
            grid=(B_pad // Bb,),
            in_specs=[
                pl.BlockSpec((Bb, T_pad, D), lambda i: (i, 0, 0)),
                pl.BlockSpec((Bb * T_cmp, 1), lambda i: (i, 0)),
                w_spec,
                b_spec,
            ],
            # OD < 128 gives a masked store; for production widths pad OD to 128
            # in the wrapper for a lane-dense vst (most impactful on v5e).
            out_specs=pl.BlockSpec((Bb, OD), lambda i: (i, 0)),
            compiler_params=pltpu.CompilerParams(
                dimension_semantics=("parallel",),
                vmem_limit_bytes=vmem_limit),
        )(x_p, mask, w_in, b_in)
        return jax.block_until_ready(out)

    try:
        out = run(True)
    except Exception:
        # Fallback if this JAX/Mosaic build rejects pl.Buffered(1) single-buffering.
        out = run(False)
    return out[:B]


def init_params(key, n_dim, out_dim):
    """Deterministic PyTorch-style Conv1d init (kaiming-uniform bounds)."""
    od = out_dim // 4
    OD = 4 * od
    keys = jax.random.split(key, 8)
    W = jnp.zeros((4, n_dim, OD), jnp.float32)
    biases = []
    for i, k in enumerate((1, 2, 3, 4)):
        bound = 1.0 / float(n_dim * k) ** 0.5
        wk = jax.random.uniform(keys[2 * i], (od, n_dim, k),
                                minval=-bound, maxval=bound, dtype=jnp.float32)
        bk = jax.random.uniform(keys[2 * i + 1], (od,),
                                minval=-bound, maxval=bound, dtype=jnp.float32)
        for j in range(k):   # tap j of conv_k{k} -> combined weight slab j
            W = W.at[j, :, i * od:(i + 1) * od].set(wk[:, :, j].T)
        biases.append(bk)
    bias = jnp.concatenate(biases).reshape(1, OD)
    return W, bias


def _reference(x, x_l, W, bias):
    """Pure-JAX reference of the same forward (correctness check)."""
    B, T, D = x.shape
    x_pad = jnp.concatenate([x, jnp.zeros((B, 3, D), x.dtype)], axis=1)
    acc = jnp.zeros((B, T, W.shape[-1]), jnp.float32)
    for j in range(4):
        acc = acc + jnp.einsum('btd,do->bto', x_pad[:, j:j + T, :], W[j])
    acc = jnp.maximum(acc + bias[None], 0.0)
    mask = jnp.arange(T)[None, :, None] < x_l[:, None, None]
    return jnp.max(jnp.where(mask, acc, -jnp.inf), axis=1)


if __name__ == "__main__":
    # Small shapes consistent with the module's forward (out_dim divisible by 4).
    B, T, n_dim, out_dim = 2, 10, 16, 32

    key = jax.random.PRNGKey(0)
    kx, kp = jax.random.split(key)
    x = jax.random.normal(kx, (B, T, n_dim), dtype=jnp.float32)
    x_l = jnp.array([7, 10], dtype=jnp.int32)   # valid lengths per batch element

    W, bias = init_params(kp, n_dim, out_dim)

    out = conv1d_forward(x, x_l, W, bias)
    jax.block_until_ready(out)

    # Compare against the pure-JAX reference on the same bf16-rounded operands.
    x_c = x.astype(jnp.bfloat16).astype(jnp.float32)
    W_c = W.astype(jnp.bfloat16).astype(jnp.float32)
    ref = _reference(x_c, x_l, W_c, bias)
    assert out.shape == (B, out_dim)
    assert jnp.allclose(out, ref, atol=1e-2), "mismatch vs pure-JAX reference"

    print("KERNEL_OK")
</pallas_src>

<mosaic_0001>
module attributes {stable_mosaic.version = 11 : i64} {
  func.func @_conv_maxpool_kernel(%arg0: i32, %arg1: memref<8x32x16xbf16, #tpu.memory_space<vmem>>, %arg2: memref<128x1xf32, #tpu.memory_space<vmem>>, %arg3: memref<4x16x32xbf16, #tpu.memory_space<vmem>>, %arg4: memref<1x32xf32, #tpu.memory_space<vmem>>, %arg5: memref<8x32xf32, #tpu.memory_space<vmem>>) attributes {dimension_semantics = [#tpu.dimension_semantics<parallel>], iteration_bounds = array<i64: 1>, scalar_prefetch = 0 : i64, scratch_operands = 0 : i64, tpu.core_type = #tpu.core_type<tc>, window_params = [{transform_indices = @transform_0, window_bounds = array<i64: 8, 32, 16>}, {transform_indices = @transform_1, window_bounds = array<i64: 128, 1>}, {pipeline_mode = #tpu.pipeline_mode<synchronous>, transform_indices = @transform_2, window_bounds = array<i64: 4, 16, 32>}, {pipeline_mode = #tpu.pipeline_mode<synchronous>, transform_indices = @transform_3, window_bounds = array<i64: 1, 32>}, {transform_indices = @transform_4, window_bounds = array<i64: 8, 32>}]} {
    %c0 = arith.constant 0 : index
    %c0_0 = arith.constant 0 : index
    %c0_1 = arith.constant 0 : index
    %0 = vector.load %arg1[%c0, %c0_0, %c0_1] : memref<8x32x16xbf16, #tpu.memory_space<vmem>>, vector<8x16x16xbf16>
    %1 = vector.shape_cast %0 : vector<8x16x16xbf16> to vector<128x16xbf16>
    %c0_2 = arith.constant 0 : index
    %c0_3 = arith.constant 0 : index
    %c0_4 = arith.constant 0 : index
    %2 = vector.load %arg3[%c0_2, %c0_3, %c0_4] : memref<4x16x32xbf16, #tpu.memory_space<vmem>>, vector<1x16x32xbf16>
    %3 = vector.shape_cast %2 : vector<1x16x32xbf16> to vector<16x32xbf16>
    %cst = arith.constant dense<0.000000e+00> : vector<128x32xf32>
    %4 = tpu.matmul %1, %3, %cst {dimension_numbers = #tpu.dot_dimension_numbers<[1], [0], [0], [1], [0, 0, 1, 1], [], []>} : vector<128x16xbf16>, vector<16x32xbf16>, vector<128x32xf32> -> vector<128x32xf32>
    %c0_5 = arith.constant 0 : index
    %c1 = arith.constant 1 : index
    %c0_6 = arith.constant 0 : index
    %5 = vector.load %arg1[%c0_5, %c1, %c0_6] : memref<8x32x16xbf16, #tpu.memory_space<vmem>>, vector<8x16x16xbf16>
    %6 = vector.shape_cast %5 : vector<8x16x16xbf16> to vector<128x16xbf16>
    %c1_7 = arith.constant 1 : index
    %c0_8 = arith.constant 0 : index
    %c0_9 = arith.constant 0 : index
    %7 = vector.load %arg3[%c1_7, %c0_8, %c0_9] : memref<4x16x32xbf16, #tpu.memory_space<vmem>>, vector<1x16x32xbf16>
    %8 = vector.shape_cast %7 : vector<1x16x32xbf16> to vector<16x32xbf16>
    %cst_10 = arith.constant dense<0.000000e+00> : vector<128x32xf32>
    %9 = tpu.matmul %6, %8, %cst_10 {dimension_numbers = #tpu.dot_dimension_numbers<[1], [0], [0], [1], [0, 0, 1, 1], [], []>} : vector<128x16xbf16>, vector<16x32xbf16>, vector<128x32xf32> -> vector<128x32xf32>
    %10 = arith.addf %4, %9 : vector<128x32xf32>
    %c0_11 = arith.constant 0 : index
    %c2 = arith.constant 2 : index
    %c0_12 = arith.constant 0 : index
    %11 = vector.load %arg1[%c0_11, %c2, %c0_12] : memref<8x32x16xbf16, #tpu.memory_space<vmem>>, vector<8x16x16xbf16>
    %12 = vector.shape_cast %11 : vector<8x16x16xbf16> to vector<128x16xbf16>
    %c2_13 = arith.constant 2 : index
    %c0_14 = arith.constant 0 : index
    %c0_15 = arith.constant 0 : index
    %13 = vector.load %arg3[%c2_13, %c0_14, %c0_15] : memref<4x16x32xbf16, #tpu.memory_space<vmem>>, vector<1x16x32xbf16>
    %14 = vector.shape_cast %13 : vector<1x16x32xbf16> to vector<16x32xbf16>
    %cst_16 = arith.constant dense<0.000000e+00> : vector<128x32xf32>
    %15 = tpu.matmul %12, %14, %cst_16 {dimension_numbers = #tpu.dot_dimension_numbers<[1], [0], [0], [1], [0, 0, 1, 1], [], []>} : vector<128x16xbf16>, vector<16x32xbf16>, vector<128x32xf32> -> vector<128x32xf32>
    %16 = arith.addf %10, %15 : vector<128x32xf32>
    %c0_17 = arith.constant 0 : index
    %c3 = arith.constant 3 : index
    %c0_18 = arith.constant 0 : index
    %17 = vector.load %arg1[%c0_17, %c3, %c0_18] : memref<8x32x16xbf16, #tpu.memory_space<vmem>>, vector<8x16x16xbf16>
    %18 = vector.shape_cast %17 : vector<8x16x16xbf16> to vector<128x16xbf16>
    %c3_19 = arith.constant 3 : index
    %c0_20 = arith.constant 0 : index
    %c0_21 = arith.constant 0 : index
    %19 = vector.load %arg3[%c3_19, %c0_20, %c0_21] : memref<4x16x32xbf16, #tpu.memory_space<vmem>>, vector<1x16x32xbf16>
    %20 = vector.shape_cast %19 : vector<1x16x32xbf16> to vector<16x32xbf16>
    %cst_22 = arith.constant dense<0.000000e+00> : vector<128x32xf32>
    %21 = tpu.matmul %18, %20, %cst_22 {dimension_numbers = #tpu.dot_dimension_numbers<[1], [0], [0], [1], [0, 0, 1, 1], [], []>} : vector<128x16xbf16>, vector<16x32xbf16>, vector<128x32xf32> -> vector<128x32xf32>
    %22 = arith.addf %16, %21 : vector<128x32xf32>
    %c0_23 = arith.constant 0 : index
    %c0_24 = arith.constant 0 : index
    %23 = vector.load %arg4[%c0_23, %c0_24] : memref<1x32xf32, #tpu.memory_space<vmem>>, vector<1x32xf32>
    %24 = vector.broadcast %23 : vector<1x32xf32> to vector<128x32xf32>
    %25 = arith.addf %22, %24 : vector<128x32xf32>
    %cst_25 = arith.constant 0.000000e+00 : f32
    %26 = vector.broadcast %cst_25 : f32 to vector<128x32xf32>
    %27 = arith.maximumf %25, %26 : vector<128x32xf32>
    %c0_26 = arith.constant 0 : index
    %c0_27 = arith.constant 0 : index
    %28 = vector.load %arg2[%c0_26, %c0_27] : memref<128x1xf32, #tpu.memory_space<vmem>>, vector<128x1xf32>
    %29 = vector.broadcast %28 : vector<128x1xf32> to vector<128x32xf32>
    %30 = arith.mulf %27, %29 : vector<128x32xf32>
    %31 = vector.shape_cast %30 : vector<128x32xf32> to vector<8x16x32xf32>
    %cst_28 = arith.constant dense<0xFF800000> : vector<8x32xf32>
    %32 = vector.multi_reduction <maximumf>, %31, %cst_28 [1] : vector<8x16x32xf32> to vector<8x32xf32>
    %c0_29 = arith.constant 0 : index
    %c0_30 = arith.constant 0 : index
    %33 = vector.load %arg5[%c0_29, %c0_30] : memref<8x32xf32, #tpu.memory_space<vmem>>, vector<8x32xf32>
    tpu.vector_store %arg5[%c0_29, %c0_30], %32 {strides = array<i32>} : memref<8x32xf32, #tpu.memory_space<vmem>>, vector<8x32xf32>,
    return
  }
  func.func @transform_0(%arg0: i32) -> (i32, i32, i32) {
    %c0_i32 = arith.constant 0 : i32
    %c0_i32_0 = arith.constant 0 : i32
    %c0_i32_1 = arith.constant 0 : i32
    return %arg0, %c0_i32, %c0_i32_0 : i32, i32, i32
  }
  func.func @transform_1(%arg0: i32) -> (i32, i32) {
    %c0_i32 = arith.constant 0 : i32
    %c0_i32_0 = arith.constant 0 : i32
    return %arg0, %c0_i32 : i32, i32
  }
  func.func @transform_2(%arg0: i32) -> (i32, i32, i32) {
    %c0_i32 = arith.constant 0 : i32
    %c0_i32_0 = arith.constant 0 : i32
    %c0_i32_1 = arith.constant 0 : i32
    %c0_i32_2 = arith.constant 0 : i32
    return %c0_i32, %c0_i32_0, %c0_i32_1 : i32, i32, i32
  }
  func.func @transform_3(%arg0: i32) -> (i32, i32) {
    %c0_i32 = arith.constant 0 : i32
    %c0_i32_0 = arith.constant 0 : i32
    %c0_i32_1 = arith.constant 0 : i32
    return %c0_i32, %c0_i32_0 : i32, i32
  }
  func.func @transform_4(%arg0: i32) -> (i32, i32) {
    %c0_i32 = arith.constant 0 : i32
    %c0_i32_0 = arith.constant 0 : i32
    return %arg0, %c0_i32 : i32, i32
  }
}

module attributes {stable_mosaic.version = 11 : i64} {
  func.func @_conv_maxpool_kernel(%arg0: i32, %arg1: memref<8x32x16xbf16, #tpu.memory_space<vmem>>, %arg2: memref<128x1xf32, #tpu.memory_space<vmem>>, %arg3: memref<4x16x32xbf16, #tpu.memory_space<vmem>>, %arg4: memref<1x32xf32, #tpu.memory_space<vmem>>, %arg5: memref<8x32xf32, #tpu.memory_space<vmem>>) attributes {dimension_semantics = [#tpu.dimension_semantics<parallel>], iteration_bounds = array<i64: 1>, scalar_prefetch = 0 : i64, scratch_operands = 0 : i64, tpu.core_type = #tpu.core_type<tc>, window_params = [{transform_indices = @transform_0, window_bounds = array<i64: 8, 32, 16>}, {transform_indices = @transform_1, window_bounds = array<i64: 128, 1>}, {pipeline_mode = #tpu.pipeline_mode<synchronous>, transform_indices = @transform_2, window_bounds = array<i64: 4, 16, 32>}, {pipeline_mode = #tpu.pipeline_mode<synchronous>, transform_indices = @transform_3, window_bounds = array<i64: 1, 32>}, {transform_indices = @transform_4, window_bounds = array<i64: 8, 32>}]} {
    %c0 = arith.constant 0 : index
    %c0_0 = arith.constant 0 : index
    %c0_1 = arith.constant 0 : index
    %0 = vector.load %arg1[%c0, %c0_0, %c0_1] : memref<8x32x16xbf16, #tpu.memory_space<vmem>>, vector<8x16x16xbf16>
    %1 = vector.shape_cast %0 : vector<8x16x16xbf16> to vector<128x16xbf16>
    %c0_2 = arith.constant 0 : index
    %c0_3 = arith.constant 0 : index
    %c0_4 = arith.constant 0 : index
    %2 = vector.load %arg3[%c0_2, %c0_3, %c0_4] : memref<4x16x32xbf16, #tpu.memory_space<vmem>>, vector<1x16x32xbf16>
    %3 = vector.shape_cast %2 : vector<1x16x32xbf16> to vector<16x32xbf16>
    %cst = arith.constant dense<0.000000e+00> : vector<128x32xf32>
    %4 = tpu.matmul %1, %3, %cst {dimension_numbers = #tpu.dot_dimension_numbers<[1], [0], [0], [1], [0, 0, 1, 1], [], []>} : vector<128x16xbf16>, vector<16x32xbf16>, vector<128x32xf32> -> vector<128x32xf32>
    %c0_5 = arith.constant 0 : index
    %c1 = arith.constant 1 : index
    %c0_6 = arith.constant 0 : index
    %5 = vector.load %arg1[%c0_5, %c1, %c0_6] : memref<8x32x16xbf16, #tpu.memory_space<vmem>>, vector<8x16x16xbf16>
    %6 = vector.shape_cast %5 : vector<8x16x16xbf16> to vector<128x16xbf16>
    %c1_7 = arith.constant 1 : index
    %c0_8 = arith.constant 0 : index
    %c0_9 = arith.constant 0 : index
    %7 = vector.load %arg3[%c1_7, %c0_8, %c0_9] : memref<4x16x32xbf16, #tpu.memory_space<vmem>>, vector<1x16x32xbf16>
    %8 = vector.shape_cast %7 : vector<1x16x32xbf16> to vector<16x32xbf16>
    %cst_10 = arith.constant dense<0.000000e+00> : vector<128x32xf32>
    %9 = tpu.matmul %6, %8, %cst_10 {dimension_numbers = #tpu.dot_dimension_numbers<[1], [0], [0], [1], [0, 0, 1, 1], [], []>} : vector<128x16xbf16>, vector<16x32xbf16>, vector<128x32xf32> -> vector<128x32xf32>
    %10 = arith.addf %4, %9 : vector<128x32xf32>
    %c0_11 = arith.constant 0 : index
    %c2 = arith.constant 2 : index
    %c0_12 = arith.constant 0 : index
    %11 = vector.load %arg1[%c0_11, %c2, %c0_12] : memref<8x32x16xbf16, #tpu.memory_space<vmem>>, vector<8x16x16xbf16>
    %12 = vector.shape_cast %11 : vector<8x16x16xbf16> to vector<128x16xbf16>
    %c2_13 = arith.constant 2 : index
    %c0_14 = arith.constant 0 : index
    %c0_15 = arith.constant 0 : index
    %13 = vector.load %arg3[%c2_13, %c0_14, %c0_15] : memref<4x16x32xbf16, #tpu.memory_space<vmem>>, vector<1x16x32xbf16>
    %14 = vector.shape_cast %13 : vector<1x16x32xbf16> to vector<16x32xbf16>
    %cst_16 = arith.constant dense<0.000000e+00> : vector<128x32xf32>
    %15 = tpu.matmul %12, %14, %cst_16 {dimension_numbers = #tpu.dot_dimension_numbers<[1], [0], [0], [1], [0, 0, 1, 1], [], []>} : vector<128x16xbf16>, vector<16x32xbf16>, vector<128x32xf32> -> vector<128x32xf32>
    %16 = arith.addf %10, %15 : vector<128x32xf32>
    %c0_17 = arith.constant 0 : index
    %c3 = arith.constant 3 : index
    %c0_18 = arith.constant 0 : index
    %17 = vector.load %arg1[%c0_17, %c3, %c0_18] : memref<8x32x16xbf16, #tpu.memory_space<vmem>>, vector<8x16x16xbf16>
    %18 = vector.shape_cast %17 : vector<8x16x16xbf16> to vector<128x16xbf16>
    %c3_19 = arith.constant 3 : index
    %c0_20 = arith.constant 0 : index
    %c0_21 = arith.constant 0 : index
    %19 = vector.load %arg3[%c3_19, %c0_20, %c0_21] : memref<4x16x32xbf16, #tpu.memory_space<vmem>>, vector<1x16x32xbf16>
    %20 = vector.shape_cast %19 : vector<1x16x32xbf16> to vector<16x32xbf16>
    %cst_22 = arith.constant dense<0.000000e+00> : vector<128x32xf32>
    %21 = tpu.matmul %18, %20, %cst_22 {dimension_numbers = #tpu.dot_dimension_numbers<[1], [0], [0], [1], [0, 0, 1, 1], [], []>} : vector<128x16xbf16>, vector<16x32xbf16>, vector<128x32xf32> -> vector<128x32xf32>
    %22 = arith.addf %16, %21 : vector<128x32xf32>
    %c0_23 = arith.constant 0 : index
    %c0_24 = arith.constant 0 : index
    %23 = vector.load %arg4[%c0_23, %c0_24] : memref<1x32xf32, #tpu.memory_space<vmem>>, vector<1x32xf32>
    %24 = vector.broadcast %23 : vector<1x32xf32> to vector<128x32xf32>
    %25 = arith.addf %22, %24 : vector<128x32xf32>
    %cst_25 = arith.constant 0.000000e+00 : f32
    %26 = vector.broadcast %cst_25 : f32 to vector<128x32xf32>
    %27 = arith.maximumf %25, %26 : vector<128x32xf32>
    %c0_26 = arith.constant 0 : index
    %c0_27 = arith.constant 0 : index
    %28 = vector.load %arg2[%c0_26, %c0_27] : memref<128x1xf32, #tpu.memory_space<vmem>>, vector<128x1xf32>
    %29 = vector.broadcast %28 : vector<128x1xf32> to vector<128x32xf32>
    %30 = arith.mulf %27, %29 : vector<128x32xf32>
    %31 = vector.shape_cast %30 : vector<128x32xf32> to vector<8x16x32xf32>
    %cst_28 = arith.constant dense<0xFF800000> : vector<8x32xf32>
    %32 = vector.multi_reduction <maximumf>, %31, %cst_28 [1] : vector<8x16x32xf32> to vector<8x32xf32>
    %c0_29 = arith.constant 0 : index
    %c0_30 = arith.constant 0 : index
    %33 = vector.load %arg5[%c0_29, %c0_30] : memref<8x32xf32, #tpu.memory_space<vmem>>, vector<8x32xf32>
    tpu.vector_store %arg5[%c0_29, %c0_30], %32 {strides = array<i32>} : memref<8x32xf32, #tpu.memory_space<vmem>>, vector<8x32xf32>,
    return
  }
  func.func @transform_0(%arg0: i32) -> (i32, i32, i32) {
    %c0_i32 = arith.constant 0 : i32
    %c0_i32_0 = arith.constant 0 : i32
    %c0_i32_1 = arith.constant 0 : i32
    return %arg0, %c0_i32, %c0_i32_0 : i32, i32, i32
  }
  func.func @transform_1(%arg0: i32) -> (i32, i32) {
    %c0_i32 = arith.constant 0 : i32
    %c0_i32_0 = arith.constant 0 : i32
    return %arg0, %c0_i32 : i32, i32
  }
  func.func @transform_2(%arg0: i32) -> (i32, i32, i32) {
    %c0_i32 = arith.constant 0 : i32
    %c0_i32_0 = arith.constant 0 : i32
    %c0_i32_1 = arith.constant 0 : i32
    %c0_i32_2 = arith.constant 0 : i32
    return %c0_i32, %c0_i32_0, %c0_i32_1 : i32, i32, i32
  }
  func.func @transform_3(%arg0: i32) -> (i32, i32) {
    %c0_i32 = arith.constant 0 : i32
    %c0_i32_0 = arith.constant 0 : i32
    %c0_i32_1 = arith.constant 0 : i32
    return %c0_i32, %c0_i32_0 : i32, i32
  }
  func.func @transform_4(%arg0: i32) -> (i32, i32) {
    %c0_i32 = arith.constant 0 : i32
    %c0_i32_0 = arith.constant 0 : i32
    return %arg0, %c0_i32 : i32, i32
  }
}

</mosaic_0001>

<llo_original>
// kernel: tpu_custom_call.1
$region0: #{tpu_custom_call.1}
  #allocation0 [shape = 'u32[]', space=smem, size = 0x4, offset = 0x4, fixed_abs, tag = 'smem constant byte address 0x4 - core index']
  #allocation1 [shape = 'u32[144,128]{1,0:T(1,128)}', space=vmem, size = 0x12000, scoped, tag = 'internal scratch']
  %s0 = inlined_call_operand.vmem [shape: bf16[8,32,16], index: 0, kind: input, shape index: {}]
  %s1 = inlined_call_operand.vmem [shape: f32[128,1], index: 1, kind: input, shape index: {}]
  %s2 = inlined_call_operand.vmem [shape: bf16[4,16,32], index: 2, kind: input, shape index: {}]
  %s3 = inlined_call_operand.vmem [shape: f32[1,32], index: 3, kind: input, shape index: {}]
  %s4 = inlined_call_operand.hbm [shape: f32[8,32], index: 4, kind: output, shape index: {}]
  %s5 = sld [smem:[#allocation0]]
  $region26: #{tpu_custom_call.1} parent=0
    _
  %s7 = ssub.s32 1, %s5
  %s8 = scalar_select 0, %s7, %s5
  $region1: #{tpu_custom_call.1} parent=0
    #allocation2 [shape = 'u8[4096]{0}', space=vmem, size = 0x1000, scoped, tag = 'output window, operand 0, single buffered']
    #allocation3 [shape = 's32[1]{0}', space=sflag, size = 0x4, scoped, tag = 'scoped memory for tpu_custom_call.1']
    %9 = vsyncpa [#allocation3], 0
    // Predicated region
    $region2: #{tpu_custom_call.1} parent=1 // pred_check
      _
    $region3: #{tpu_custom_call.1} parent=1 // pred_check_branch
      %11 = sbr.rel (0) target = $region5
    $region4: #{tpu_custom_call.1} parent=1 // pred_region
      _
    $region5: #{tpu_custom_call.1} parent=1 // pred_fallthru
      _
    // Predicated region
    $region6: #{tpu_custom_call.1} parent=1 // pred_check
      _
    $region7: #{tpu_custom_call.1} parent=1 // pred_check_branch
      %13 = sbr.rel (0) target = $region9
    $region8: #{tpu_custom_call.1} parent=1 // pred_region
      _
    $region9: #{tpu_custom_call.1} parent=1 // pred_fallthru
      _
    // Predicated region
    $region10: #{tpu_custom_call.1} parent=1 // pred_check
      _
    $region11: #{tpu_custom_call.1} parent=1 // pred_check_branch
      %15 = sbr.rel (0) target = $region13
    $region12: #{tpu_custom_call.1} parent=1 // pred_region
      _
    $region13: #{tpu_custom_call.1} parent=1 // pred_fallthru
      _
    // Predicated region
    $region14: #{tpu_custom_call.1} parent=1 // pred_check
      _
    $region15: #{tpu_custom_call.1} parent=1 // pred_check_branch
      %17 = sbr.rel (0) target = $region17
    $region16: #{tpu_custom_call.1} parent=1 // pred_region
      _
    $region17: #{tpu_custom_call.1} parent=1 // pred_fallthru
      _
    %v19 = vld [vmem:[%s0] sm:$0xf]
    %v20 = vld [vmem:[%s0 + $0x4] sm:$0xf]
    %v21 = vld [vmem:[%s0 + $0x10] sm:$0xf]
    %v22 = vld [vmem:[%s0 + $0x14] sm:$0xf]
    %v23 = vld [vmem:[%s0 + $0x20] sm:$0xf]
    %v24 = vld [vmem:[%s0 + $0x24] sm:$0xf]
    %v25 = vld [vmem:[%s0 + $0x30] sm:$0xf]
    %v26 = vld [vmem:[%s0 + $0x34] sm:$0xf]
    %v27 = vld [vmem:[%s0 + $0x40] sm:$0xf]
    %v28 = vld [vmem:[%s0 + $0x44] sm:$0xf]
    %v29 = vld [vmem:[%s0 + $0x50] sm:$0xf]
    %v30 = vld [vmem:[%s0 + $0x54] sm:$0xf]
    %v31 = vld [vmem:[%s0 + $0x60] sm:$0xf]
    %v32 = vld [vmem:[%s0 + $0x64] sm:$0xf]
    %v33 = vld [vmem:[%s0 + $0x70] sm:$0xf]
    %v34 = vld [vmem:[%s0 + $0x74] sm:$0xf]
    %v35 = vld [vmem:[%s2] sm:$0xf]
    %v36 = vld [vmem:[%s2 + $0x4] sm:$0xf]
    %v37 = vld [vmem:[%s0 + $0x8] sm:$0x1]
    %v38 = vld [vmem:[%s0 + $0x18] sm:$0x1]
    %v39 = vld [vmem:[%s0 + $0x28] sm:$0x1]
    %v40 = vld [vmem:[%s0 + $0x38] sm:$0x1]
    %v41 = vld [vmem:[%s0 + $0x48] sm:$0x1]
    %v42 = vld [vmem:[%s0 + $0x58] sm:$0x1]
    %v43 = vld [vmem:[%s0 + $0x68] sm:$0x1]
    %v44 = vld [vmem:[%s0 + $0x78] sm:$0x1]
    %vm45 = vsmask.f32 3328
    %vm46 = vsmask.f32 7440
    %vm47 = vmor %vm45, %vm46
    %v49 = vshrl.u32 %v19, 16
    %v51 = vrot.slane %v49, 4
    %v52 = vshll.u32 %v19, 16
    %v54 = vrot.slane %v52, 5
    %v55 = vor.u32 %v51, %v54
    %v56 = vrot.slane %v55, 4
    %v58 = vshll.u32 %v20, 16
    %v60 = vrot.slane %v58, 5
    %v61 = vsel %vm47, %v56, %v60
    %v62 = vshrl.u32 %v20, 16
    %v64 = vrot.slane %v62, 4
    %v65 = vor.u32 %v64, %v60
    %v66 = vrot.slane %v65, 4
    %v68 = vshll.u32 %v37, 16
    %v70 = vrot.slane %v68, 5
    %v71 = vsel %vm47, %v66, %v70
    %v73 = vshrl.u32 %v21, 16
    %v75 = vrot.slane %v73, 4
    %v76 = vshll.u32 %v21, 16
    %v78 = vrot.slane %v76, 5
    %v79 = vor.u32 %v75, %v78
    %v80 = vrot.slane %v79, 4
    %v82 = vshll.u32 %v22, 16
    %v84 = vrot.slane %v82, 5
    %v85 = vsel %vm47, %v80, %v84
    %v86 = vshrl.u32 %v22, 16
    %v88 = vrot.slane %v86, 4
    %v89 = vor.u32 %v88, %v84
    %v90 = vrot.slane %v89, 4
    %v92 = vshll.u32 %v38, 16
    %v94 = vrot.slane %v92, 5
    %v95 = vsel %vm47, %v90, %v94
    %v97 = vshrl.u32 %v23, 16
    %v99 = vrot.slane %v97, 4
    %v100 = vshll.u32 %v23, 16
    %v102 = vrot.slane %v100, 5
    %v103 = vor.u32 %v99, %v102
    %v104 = vrot.slane %v103, 4
    %v106 = vshll.u32 %v24, 16
    %v108 = vrot.slane %v106, 5
    %v109 = vsel %vm47, %v104, %v108
    %v110 = vshrl.u32 %v24, 16
    %v112 = vrot.slane %v110, 4
    %v113 = vor.u32 %v112, %v108
    %v114 = vrot.slane %v113, 4
    %v116 = vshll.u32 %v39, 16
    %v118 = vrot.slane %v116, 5
    %v119 = vsel %vm47, %v114, %v118
    %v121 = vshrl.u32 %v25, 16
    %v123 = vrot.slane %v121, 4
    %v124 = vshll.u32 %v25, 16
    %v126 = vrot.slane %v124, 5
    %v127 = vor.u32 %v123, %v126
    %v128 = vrot.slane %v127, 4
    %v130 = vshll.u32 %v26, 16
    %v132 = vrot.slane %v130, 5
    %v133 = vsel %vm47, %v128, %v132
    %v134 = vshrl.u32 %v26, 16
    %v136 = vrot.slane %v134, 4
    %v137 = vor.u32 %v136, %v132
    %v138 = vrot.slane %v137, 4
    %v140 = vshll.u32 %v40, 16
    %v142 = vrot.slane %v140, 5
    %v143 = vsel %vm47, %v138, %v142
    %v145 = vshrl.u32 %v27, 16
    %v147 = vrot.slane %v145, 4
    %v148 = vshll.u32 %v27, 16
    %v150 = vrot.slane %v148, 5
    %v151 = vor.u32 %v147, %v150
    %v152 = vrot.slane %v151, 4
    %v154 = vshll.u32 %v28, 16
    %v156 = vrot.slane %v154, 5
    %v157 = vsel %vm47, %v152, %v156
    %v158 = vshrl.u32 %v28, 16
    %v160 = vrot.slane %v158, 4
    %v161 = vor.u32 %v160, %v156
    %v162 = vrot.slane %v161, 4
    %v164 = vshll.u32 %v41, 16
    %v166 = vrot.slane %v164, 5
    %v167 = vsel %vm47, %v162, %v166
    %v169 = vshrl.u32 %v29, 16
    %v171 = vrot.slane %v169, 4
    %v172 = vshll.u32 %v29, 16
    %v174 = vrot.slane %v172, 5
    %v175 = vor.u32 %v171, %v174
    %v176 = vrot.slane %v175, 4
    %v178 = vshll.u32 %v30, 16
    %v180 = vrot.slane %v178, 5
    %v181 = vsel %vm47, %v176, %v180
    %v182 = vshrl.u32 %v30, 16
    %v184 = vrot.slane %v182, 4
    %v185 = vor.u32 %v184, %v180
    %v186 = vrot.slane %v185, 4
    %v188 = vshll.u32 %v42, 16
    %v190 = vrot.slane %v188, 5
    %v191 = vsel %vm47, %v186, %v190
    %v193 = vshrl.u32 %v31, 16
    %v195 = vrot.slane %v193, 4
    %v196 = vshll.u32 %v31, 16
    %v198 = vrot.slane %v196, 5
    %v199 = vor.u32 %v195, %v198
    %v200 = vrot.slane %v199, 4
    %v202 = vshll.u32 %v32, 16
    %v204 = vrot.slane %v202, 5
    %v205 = vsel %vm47, %v200, %v204
    %v206 = vshrl.u32 %v32, 16
    %v208 = vrot.slane %v206, 4
    %v209 = vor.u32 %v208, %v204
    %v210 = vrot.slane %v209, 4
    %v212 = vshll.u32 %v43, 16
    %v214 = vrot.slane %v212, 5
    %v215 = vsel %vm47, %v210, %v214
    %v217 = vshrl.u32 %v33, 16
    %v219 = vrot.slane %v217, 4
    %v220 = vshll.u32 %v33, 16
    %v222 = vrot.slane %v220, 5
    %v223 = vor.u32 %v219, %v222
    %v224 = vrot.slane %v223, 4
    %v226 = vshll.u32 %v34, 16
    %v228 = vrot.slane %v226, 5
    %v229 = vsel %vm47, %v224, %v228
    %v230 = vshrl.u32 %v34, 16
    %v232 = vrot.slane %v230, 4
    %v233 = vor.u32 %v232, %v228
    %v234 = vrot.slane %v233, 4
    %v236 = vshll.u32 %v44, 16
    %v238 = vrot.slane %v236, 5
    %v239 = vsel %vm47, %v234, %v238
    %s240 = scalar_lea.vmem %s2, 8
    %v241 = vld [vmem:[%s240] sm:$0xf]
    %v242 = vld [vmem:[%s240 + $0x4] sm:$0xf]
    %v243 = vunpack.c.l.b16 %v61
    %v244 = vunpack.c.l.b16 %v71
    %v245 = vunpack.c.l.b16 %v85
    %v246 = vunpack.c.l.b16 %v95
    %v247 = vunpack.c.l.b16 %v109
    %v248 = vunpack.c.l.b16 %v119
    %v249 = vunpack.c.l.b16 %v133
    %v250 = vunpack.c.l.b16 %v143
    %v251 = vunpack.c.l.b16 %v157
    %v252 = vunpack.c.l.b16 %v167
    %v253 = vunpack.c.l.b16 %v181
    %v254 = vunpack.c.l.b16 %v191
    %v255 = vunpack.c.l.b16 %v205
    %v256 = vunpack.c.l.b16 %v215
    %v257 = vunpack.c.l.b16 %v229
    %v258 = vunpack.c.l.b16 %v239
    %v259 = vpack.c.b16 %v244, %v243
    %v260 = vpack.c.b16 %v246, %v245
    %v261 = vpack.c.b16 %v248, %v247
    %v262 = vpack.c.b16 %v250, %v249
    %v263 = vpack.c.b16 %v252, %v251
    %v264 = vpack.c.b16 %v254, %v253
    %v265 = vpack.c.b16 %v256, %v255
    %v266 = vpack.c.b16 %v258, %v257
    %v269 = vunpack.c.l.b16 %v241
    %v270 = vunpack.c.l.b16 %v242
    %v271 = vpack.c.b16 %v270, %v269
    %vm273 = vcmask 130048
    %v275 = vsel %vm273, %v259, 0
    %v278 = vsel %vm273, %v260, 0
    %v281 = vsel %vm273, %v261, 0
    %v284 = vsel %vm273, %v262, 0
    %v287 = vsel %vm273, %v263, 0
    %v290 = vsel %vm273, %v264, 0
    %v293 = vsel %vm273, %v265, 0
    %v296 = vsel %vm273, %v266, 0
    %298 = vmatprep.subr.bf16.mxu0 0
    %299 = vmatpush1.bf16.msra.mxu0 0
    %300 = vmatprep.subr.bf16.mxu0 0
    %301 = vmatpush1.bf16.msra.mxu0 0
    %302 = vmatprep.subr.bf16.mxu0 0
    %303 = vmatpush1.bf16.msra.mxu0 0
    %304 = vmatprep.subr.bf16.mxu0 0
    %305 = vmatpush1.bf16.msra.mxu0 0
    %306 = vmatprep.subr.bf16.mxu0 0
    %307 = vmatpush1.bf16.msra.mxu0 0
    %308 = vmatprep.subr.bf16.mxu0 0
    %309 = vmatpush1.bf16.msra.mxu0 0
    %310 = vmatprep.subr.bf16.mxu0 0
    %311 = vmatpush1.bf16.msra.mxu0 0
    %312 = vmatprep.subr.bf16.mxu0 0
    %313 = vmatpush1.bf16.msra.mxu0 %v271
    %314 = vmatprep.subr.bf16.mxu0 0
    %315 = vmatpush2.bf16.msra.mxu0 0
    %316 = vmatprep.subr.bf16.mxu0 0
    %317 = vmatpush2.bf16.msra.mxu0 0
    %318 = vmatprep.subr.bf16.mxu0 0
    %319 = vmatpush2.bf16.msra.mxu0 0
    %320 = vmatprep.subr.bf16.mxu0 0
    %321 = vmatpush2.bf16.msra.mxu0 0
    %322 = vmatprep.subr.bf16.mxu0 0
    %323 = vmatpush2.bf16.msra.mxu0 0
    %324 = vmatprep.subr.bf16.mxu0 0
    %325 = vmatpush2.bf16.msra.mxu0 0
    %326 = vmatprep.subr.bf16.mxu0 0
    %327 = vmatpush2.bf16.msra.mxu0 0
    %328 = vmatprep.subr.bf16.mxu0 0
    %329 = vmatpush2.bf16.msra.mxu0 0
    %330 = vmatprep.mubr.bf16.mxu0 0
    %331 = vmatmul.mubr.bf16.gmra.mxu0 %v275
    %v332 = vpop.f32.mrf.mxu0
    %v333 = vadd.f32 0.0, %v332
    %v334 = vpop.f32.mrf.mxu0
    %v335 = vpop.f32.mrf.mxu0
    %v336 = vadd.f32 0.0, %v335
    %v337 = vpop.f32.mrf.mxu0
    %338 = vmatprep.mubr.bf16.mxu0 0
    %339 = vmatmul.mubr.bf16.gmra.mxu0 %v278
    %v340 = vpop.f32.mrf.mxu0
    %v341 = vadd.f32 0.0, %v340
    %v342 = vpop.f32.mrf.mxu0
    %v343 = vpop.f32.mrf.mxu0
    %v344 = vadd.f32 0.0, %v343
    %v345 = vpop.f32.mrf.mxu0
    %346 = vmatprep.mubr.bf16.mxu0 0
    %347 = vmatmul.mubr.bf16.gmra.mxu0 %v281
    %v348 = vpop.f32.mrf.mxu0
    %v349 = vadd.f32 0.0, %v348
    %v350 = vpop.f32.mrf.mxu0
    %v351 = vpop.f32.mrf.mxu0
    %v352 = vadd.f32 0.0, %v351
    %v353 = vpop.f32.mrf.mxu0
    %354 = vmatprep.mubr.bf16.mxu0 0
    %355 = vmatmul.mubr.bf16.gmra.mxu0 %v284
    %v356 = vpop.f32.mrf.mxu0
    %v357 = vadd.f32 0.0, %v356
    %v358 = vpop.f32.mrf.mxu0
    %v359 = vpop.f32.mrf.mxu0
    %v360 = vadd.f32 0.0, %v359
    %v361 = vpop.f32.mrf.mxu0
    %362 = vmatprep.mubr.bf16.mxu0 0
    %363 = vmatmul.mubr.bf16.gmra.mxu0 %v287
    %v364 = vpop.f32.mrf.mxu0
    %v365 = vadd.f32 0.0, %v364
    %v366 = vpop.f32.mrf.mxu0
    %v367 = vpop.f32.mrf.mxu0
    %v368 = vadd.f32 0.0, %v367
    %v369 = vpop.f32.mrf.mxu0
    %370 = vmatprep.mubr.bf16.mxu0 0
    %371 = vmatmul.mubr.bf16.gmra.mxu0 %v290
    %v372 = vpop.f32.mrf.mxu0
    %v373 = vadd.f32 0.0, %v372
    %v374 = vpop.f32.mrf.mxu0
    %v375 = vpop.f32.mrf.mxu0
    %v376 = vadd.f32 0.0, %v375
    %v377 = vpop.f32.mrf.mxu0
    %378 = vmatprep.mubr.bf16.mxu0 0
    %379 = vmatmul.mubr.bf16.gmra.mxu0 %v293
    %v380 = vpop.f32.mrf.mxu0
    %v381 = vadd.f32 0.0, %v380
    %v382 = vpop.f32.mrf.mxu0
    %v383 = vpop.f32.mrf.mxu0
    %v384 = vadd.f32 0.0, %v383
    %v385 = vpop.f32.mrf.mxu0
    %386 = vmatprep.mubr.bf16.mxu0 0
    %387 = vmatmul.mubr.bf16.gmra.mxu0 %v296
    %v388 = vpop.f32.mrf.mxu0
    %v389 = vadd.f32 0.0, %v388
    %v390 = vpop.f32.mrf.mxu0
    %v391 = vpop.f32.mrf.mxu0
    %v392 = vadd.f32 0.0, %v391
    %v393 = vpop.f32.mrf.mxu0
    %394 = vdwg.mxu0
    %v411 = vunpack.c.l.b16 %v19
    %v412 = vunpack.c.l.b16 %v20
    %v413 = vunpack.c.l.b16 %v21
    %v414 = vunpack.c.l.b16 %v22
    %v415 = vunpack.c.l.b16 %v23
    %v416 = vunpack.c.l.b16 %v24
    %v417 = vunpack.c.l.b16 %v25
    %v418 = vunpack.c.l.b16 %v26
    %v419 = vunpack.c.l.b16 %v27
    %v420 = vunpack.c.l.b16 %v28
    %v421 = vunpack.c.l.b16 %v29
    %v422 = vunpack.c.l.b16 %v30
    %v423 = vunpack.c.l.b16 %v31
    %v424 = vunpack.c.l.b16 %v32
    %v425 = vunpack.c.l.b16 %v33
    %v426 = vunpack.c.l.b16 %v34
    %v427 = vpack.c.b16 %v412, %v411
    %v428 = vpack.c.b16 %v414, %v413
    %v429 = vpack.c.b16 %v416, %v415
    %v430 = vpack.c.b16 %v418, %v417
    %v431 = vpack.c.b16 %v420, %v419
    %v432 = vpack.c.b16 %v422, %v421
    %v433 = vpack.c.b16 %v424, %v423
    %v434 = vpack.c.b16 %v426, %v425
    %v437 = vunpack.c.l.b16 %v35
    %v438 = vunpack.c.l.b16 %v36
    %v439 = vpack.c.b16 %v438, %v437
    %v442 = vsel %vm273, %v427, 0
    %v445 = vsel %vm273, %v428, 0
    %v448 = vsel %vm273, %v429, 0
    %v451 = vsel %vm273, %v430, 0
    %v454 = vsel %vm273, %v431, 0
    %v457 = vsel %vm273, %v432, 0
    %v460 = vsel %vm273, %v433, 0
    %v463 = vsel %vm273, %v434, 0
    %465 = vmatprep.subr.bf16.mxu0 0
    %466 = vmatpush1.bf16.msra.mxu0 0
    %467 = vmatprep.subr.bf16.mxu0 0
    %468 = vmatpush1.bf16.msra.mxu0 0
    %469 = vmatprep.subr.bf16.mxu0 0
    %470 = vmatpush1.bf16.msra.mxu0 0
    %471 = vmatprep.subr.bf16.mxu0 0
    %472 = vmatpush1.bf16.msra.mxu0 0
    %473 = vmatprep.subr.bf16.mxu0 0
    %474 = vmatpush1.bf16.msra.mxu0 0
    %475 = vmatprep.subr.bf16.mxu0 0
    %476 = vmatpush1.bf16.msra.mxu0 0
    %477 = vmatprep.subr.bf16.mxu0 0
    %478 = vmatpush1.bf16.msra.mxu0 0
    %479 = vmatprep.subr.bf16.mxu0 0
    %480 = vmatpush1.bf16.msra.mxu0 %v439
    %481 = vmatprep.subr.bf16.mxu0 0
    %482 = vmatpush2.bf16.msra.mxu0 0
    %483 = vmatprep.subr.bf16.mxu0 0
    %484 = vmatpush2.bf16.msra.mxu0 0
    %485 = vmatprep.subr.bf16.mxu0 0
    %486 = vmatpush2.bf16.msra.mxu0 0
    %487 = vmatprep.subr.bf16.mxu0 0
    %488 = vmatpush2.bf16.msra.mxu0 0
    %489 = vmatprep.subr.bf16.mxu0 0
    %490 = vmatpush2.bf16.msra.mxu0 0
    %491 = vmatprep.subr.bf16.mxu0 0
    %492 = vmatpush2.bf16.msra.mxu0 0
    %493 = vmatprep.subr.bf16.mxu0 0
    %494 = vmatpush2.bf16.msra.mxu0 0
    %495 = vmatprep.subr.bf16.mxu0 0
    %496 = vmatpush2.bf16.msra.mxu0 0
    %497 = vmatprep.mubr.bf16.mxu0 0
    %498 = vmatmul.mubr.bf16.gmra.mxu0 %v442
    %v499 = vpop.f32.mrf.mxu0
    %v500 = vadd.f32 %v333, %v499
    %v501 = vpop.f32.mrf.mxu0
    %v502 = vpop.f32.mrf.mxu0
    %v503 = vadd.f32 %v336, %v502
    %v504 = vpop.f32.mrf.mxu0
    %505 = vmatprep.mubr.bf16.mxu0 0
    %506 = vmatmul.mubr.bf16.gmra.mxu0 %v445
    %v507 = vpop.f32.mrf.mxu0
    %v508 = vadd.f32 %v341, %v507
    %v509 = vpop.f32.mrf.mxu0
    %v510 = vpop.f32.mrf.mxu0
    %v511 = vadd.f32 %v344, %v510
    %v512 = vpop.f32.mrf.mxu0
    %513 = vmatprep.mubr.bf16.mxu0 0
    %514 = vmatmul.mubr.bf16.gmra.mxu0 %v448
    %v515 = vpop.f32.mrf.mxu0
    %v516 = vadd.f32 %v349, %v515
    %v517 = vpop.f32.mrf.mxu0
    %v518 = vpop.f32.mrf.mxu0
    %v519 = vadd.f32 %v352, %v518
    %v520 = vpop.f32.mrf.mxu0
    %521 = vmatprep.mubr.bf16.mxu0 0
    %522 = vmatmul.mubr.bf16.gmra.mxu0 %v451
    %v523 = vpop.f32.mrf.mxu0
    %v524 = vadd.f32 %v357, %v523
    %v525 = vpop.f32.mrf.mxu0
    %v526 = vpop.f32.mrf.mxu0
    %v527 = vadd.f32 %v360, %v526
    %v528 = vpop.f32.mrf.mxu0
    %529 = vmatprep.mubr.bf16.mxu0 0
    %530 = vmatmul.mubr.bf16.gmra.mxu0 %v454
    %v531 = vpop.f32.mrf.mxu0
    %v532 = vadd.f32 %v365, %v531
    %v533 = vpop.f32.mrf.mxu0
    %v534 = vpop.f32.mrf.mxu0
    %v535 = vadd.f32 %v368, %v534
    %v536 = vpop.f32.mrf.mxu0
    %537 = vmatprep.mubr.bf16.mxu0 0
    %538 = vmatmul.mubr.bf16.gmra.mxu0 %v457
    %v539 = vpop.f32.mrf.mxu0
    %v540 = vadd.f32 %v373, %v539
    %v541 = vpop.f32.mrf.mxu0
    %v542 = vpop.f32.mrf.mxu0
    %v543 = vadd.f32 %v376, %v542
    %v544 = vpop.f32.mrf.mxu0
    %545 = vmatprep.mubr.bf16.mxu0 0
    %546 = vmatmul.mubr.bf16.gmra.mxu0 %v460
    %v547 = vpop.f32.mrf.mxu0
    %v548 = vadd.f32 %v381, %v547
    %v549 = vpop.f32.mrf.mxu0
    %v550 = vpop.f32.mrf.mxu0
    %v551 = vadd.f32 %v384, %v550
    %v552 = vpop.f32.mrf.mxu0
    %553 = vmatprep.mubr.bf16.mxu0 0
    %554 = vmatmul.mubr.bf16.gmra.mxu0 %v463
    %v555 = vpop.f32.mrf.mxu0
    %v556 = vadd.f32 %v389, %v555
    %v557 = vpop.f32.mrf.mxu0
    %v558 = vpop.f32.mrf.mxu0
    %v559 = vadd.f32 %v392, %v558
    %v560 = vpop.f32.mrf.mxu0
    %561 = vdwg.mxu0
    %v562 = vld [vmem:[%s0] sm:$0xe]
    %v563 = vld [vmem:[%s0 + $0x10] sm:$0xe]
    %v564 = vld [vmem:[%s0 + $0x20] sm:$0xe]
    %v565 = vld [vmem:[%s0 + $0x30] sm:$0xe]
    %v566 = vld [vmem:[%s0 + $0x40] sm:$0xe]
    %v567 = vld [vmem:[%s0 + $0x50] sm:$0xe]
    %v568 = vld [vmem:[%s0 + $0x60] sm:$0xe]
    %v569 = vld [vmem:[%s0 + $0x70] sm:$0xe]
    %vm586 = vcmask 1042432
    %vm587 = vcmask 1046532
    %vm588 = vmor %vm586, %vm587
    %v589 = vrot.slane %v562, 5
    %v590 = vrot.slane %v589, 4
    %v591 = vrot.slane %v20, 5
    %v592 = vsel %vm588, %v590, %v591
    %v593 = vrot.slane %v591, 4
    %v594 = vrot.slane %v37, 5
    %v595 = vsel %vm588, %v593, %v594
    %v596 = vrot.slane %v563, 5
    %v597 = vrot.slane %v596, 4
    %v598 = vrot.slane %v22, 5
    %v599 = vsel %vm588, %v597, %v598
    %v600 = vrot.slane %v598, 4
    %v601 = vrot.slane %v38, 5
    %v602 = vsel %vm588, %v600, %v601
    %v603 = vrot.slane %v564, 5
    %v604 = vrot.slane %v603, 4
    %v605 = vrot.slane %v24, 5
    %v606 = vsel %vm588, %v604, %v605
    %v607 = vrot.slane %v605, 4
    %v608 = vrot.slane %v39, 5
    %v609 = vsel %vm588, %v607, %v608
    %v610 = vrot.slane %v565, 5
    %v611 = vrot.slane %v610, 4
    %v612 = vrot.slane %v26, 5
    %v613 = vsel %vm588, %v611, %v612
    %v614 = vrot.slane %v612, 4
    %v615 = vrot.slane %v40, 5
    %v616 = vsel %vm588, %v614, %v615
    %v617 = vrot.slane %v566, 5
    %v618 = vrot.slane %v617, 4
    %v619 = vrot.slane %v28, 5
    %v620 = vsel %vm588, %v618, %v619
    %v621 = vrot.slane %v619, 4
    %v622 = vrot.slane %v41, 5
    %v623 = vsel %vm588, %v621, %v622
    %v624 = vrot.slane %v567, 5
    %v625 = vrot.slane %v624, 4
    %v626 = vrot.slane %v30, 5
    %v627 = vsel %vm588, %v625, %v626
    %v628 = vrot.slane %v626, 4
    %v629 = vrot.slane %v42, 5
    %v630 = vsel %vm588, %v628, %v629
    %v631 = vrot.slane %v568, 5
    %v632 = vrot.slane %v631, 4
    %v633 = vrot.slane %v32, 5
    %v634 = vsel %vm588, %v632, %v633
    %v635 = vrot.slane %v633, 4
    %v636 = vrot.slane %v43, 5
    %v637 = vsel %vm588, %v635, %v636
    %v638 = vrot.slane %v569, 5
    %v639 = vrot.slane %v638, 4
    %v640 = vrot.slane %v34, 5
    %v641 = vsel %vm588, %v639, %v640
    %v642 = vrot.slane %v640, 4
    %v643 = vrot.slane %v44, 5
    %v644 = vsel %vm588, %v642, %v643
    %s645 = scalar_lea.vmem %s2, 16
    %v646 = vld [vmem:[%s645] sm:$0xf]
    %v647 = vld [vmem:[%s645 + $0x4] sm:$0xf]
    %v648 = vunpack.c.l.b16 %v592
    %v649 = vunpack.c.l.b16 %v595
    %v650 = vunpack.c.l.b16 %v599
    %v651 = vunpack.c.l.b16 %v602
    %v652 = vunpack.c.l.b16 %v606
    %v653 = vunpack.c.l.b16 %v609
    %v654 = vunpack.c.l.b16 %v613
    %v655 = vunpack.c.l.b16 %v616
    %v656 = vunpack.c.l.b16 %v620
    %v657 = vunpack.c.l.b16 %v623
    %v658 = vunpack.c.l.b16 %v627
    %v659 = vunpack.c.l.b16 %v630
    %v660 = vunpack.c.l.b16 %v634
    %v661 = vunpack.c.l.b16 %v637
    %v662 = vunpack.c.l.b16 %v641
    %v663 = vunpack.c.l.b16 %v644
    %v664 = vpack.c.b16 %v649, %v648
    %v665 = vpack.c.b16 %v651, %v650
    %v666 = vpack.c.b16 %v653, %v652
    %v667 = vpack.c.b16 %v655, %v654
    %v668 = vpack.c.b16 %v657, %v656
    %v669 = vpack.c.b16 %v659, %v658
    %v670 = vpack.c.b16 %v661, %v660
    %v671 = vpack.c.b16 %v663, %v662
    %v674 = vunpack.c.l.b16 %v646
    %v675 = vunpack.c.l.b16 %v647
    %v676 = vpack.c.b16 %v675, %v674
    %v679 = vsel %vm273, %v664, 0
    %v682 = vsel %vm273, %v665, 0
    %v685 = vsel %vm273, %v666, 0
    %v688 = vsel %vm273, %v667, 0
    %v691 = vsel %vm273, %v668, 0
    %v694 = vsel %vm273, %v669, 0
    %v697 = vsel %vm273, %v670, 0
    %v700 = vsel %vm273, %v671, 0
    %702 = vmatprep.subr.bf16.mxu0 0
    %703 = vmatpush1.bf16.msra.mxu0 0
    %704 = vmatprep.subr.bf16.mxu0 0
    %705 = vmatpush1.bf16.msra.mxu0 0
    %706 = vmatprep.subr.bf16.mxu0 0
    %707 = vmatpush1.bf16.msra.mxu0 0
    %708 = vmatprep.subr.bf16.mxu0 0
    %709 = vmatpush1.bf16.msra.mxu0 0
    %710 = vmatprep.subr.bf16.mxu0 0
    %711 = vmatpush1.bf16.msra.mxu0 0
    %712 = vmatprep.subr.bf16.mxu0 0
    %713 = vmatpush1.bf16.msra.mxu0 0
    %714 = vmatprep.subr.bf16.mxu0 0
    %715 = vmatpush1.bf16.msra.mxu0 0
    %716 = vmatprep.subr.bf16.mxu0 0
    %717 = vmatpush1.bf16.msra.mxu0 %v676
    %718 = vmatprep.subr.bf16.mxu0 0
    %719 = vmatpush2.bf16.msra.mxu0 0
    %720 = vmatprep.subr.bf16.mxu0 0
    %721 = vmatpush2.bf16.msra.mxu0 0
    %722 = vmatprep.subr.bf16.mxu0 0
    %723 = vmatpush2.bf16.msra.mxu0 0
    %724 = vmatprep.subr.bf16.mxu0 0
    %725 = vmatpush2.bf16.msra.mxu0 0
    %726 = vmatprep.subr.bf16.mxu0 0
    %727 = vmatpush2.bf16.msra.mxu0 0
    %728 = vmatprep.subr.bf16.mxu0 0
    %729 = vmatpush2.bf16.msra.mxu0 0
    %730 = vmatprep.subr.bf16.mxu0 0
    %731 = vmatpush2.bf16.msra.mxu0 0
    %732 = vmatprep.subr.bf16.mxu0 0
    %733 = vmatpush2.bf16.msra.mxu0 0
    %734 = vmatprep.mubr.bf16.mxu0 0
    %735 = vmatmul.mubr.bf16.gmra.mxu0 %v679
    %v736 = vpop.f32.mrf.mxu0
    %v737 = vadd.f32 0.0, %v736
    %v738 = vpop.f32.mrf.mxu0
    %v739 = vpop.f32.mrf.mxu0
    %v740 = vadd.f32 0.0, %v739
    %v741 = vpop.f32.mrf.mxu0
    %742 = vmatprep.mubr.bf16.mxu0 0
    %743 = vmatmul.mubr.bf16.gmra.mxu0 %v682
    %v744 = vpop.f32.mrf.mxu0
    %v745 = vadd.f32 0.0, %v744
    %v746 = vpop.f32.mrf.mxu0
    %v747 = vpop.f32.mrf.mxu0
    %v748 = vadd.f32 0.0, %v747
    %v749 = vpop.f32.mrf.mxu0
    %750 = vmatprep.mubr.bf16.mxu0 0
    %751 = vmatmul.mubr.bf16.gmra.mxu0 %v685
    %v752 = vpop.f32.mrf.mxu0
    %v753 = vadd.f32 0.0, %v752
    %v754 = vpop.f32.mrf.mxu0
    %v755 = vpop.f32.mrf.mxu0
    %v756 = vadd.f32 0.0, %v755
    %v757 = vpop.f32.mrf.mxu0
    %758 = vmatprep.mubr.bf16.mxu0 0
    %759 = vmatmul.mubr.bf16.gmra.mxu0 %v688
    %v760 = vpop.f32.mrf.mxu0
    %v761 = vadd.f32 0.0, %v760
    %v762 = vpop.f32.mrf.mxu0
    %v763 = vpop.f32.mrf.mxu0
    %v764 = vadd.f32 0.0, %v763
    %v765 = vpop.f32.mrf.mxu0
    %766 = vmatprep.mubr.bf16.mxu0 0
    %767 = vmatmul.mubr.bf16.gmra.mxu0 %v691
    %v768 = vpop.f32.mrf.mxu0
    %v769 = vadd.f32 0.0, %v768
    %v770 = vpop.f32.mrf.mxu0
    %v771 = vpop.f32.mrf.mxu0
    %v772 = vadd.f32 0.0, %v771
    %v773 = vpop.f32.mrf.mxu0
    %774 = vmatprep.mubr.bf16.mxu0 0
    %775 = vmatmul.mubr.bf16.gmra.mxu0 %v694
    %v776 = vpop.f32.mrf.mxu0
    %v777 = vadd.f32 0.0, %v776
    %v778 = vpop.f32.mrf.mxu0
    %v779 = vpop.f32.mrf.mxu0
    %v780 = vadd.f32 0.0, %v779
    %v781 = vpop.f32.mrf.mxu0
    %782 = vmatprep.mubr.bf16.mxu0 0
    %783 = vmatmul.mubr.bf16.gmra.mxu0 %v697
    %v784 = vpop.f32.mrf.mxu0
    %v785 = vadd.f32 0.0, %v784
    %v786 = vpop.f32.mrf.mxu0
    %v787 = vpop.f32.mrf.mxu0
    %v788 = vadd.f32 0.0, %v787
    %v789 = vpop.f32.mrf.mxu0
    %790 = vmatprep.mubr.bf16.mxu0 0
    %791 = vmatmul.mubr.bf16.gmra.mxu0 %v700
    %v792 = vpop.f32.mrf.mxu0
    %v793 = vadd.f32 0.0, %v792
    %v794 = vpop.f32.mrf.mxu0
    %v795 = vpop.f32.mrf.mxu0
    %v796 = vadd.f32 0.0, %v795
    %v797 = vpop.f32.mrf.mxu0
    %798 = vdwg.mxu0
    %v799 = vadd.f32 %v500, %v737
    %v800 = vadd.f32 %v503, %v740
    %v801 = vadd.f32 %v508, %v745
    %v802 = vadd.f32 %v511, %v748
    %v803 = vadd.f32 %v516, %v753
    %v804 = vadd.f32 %v519, %v756
    %v805 = vadd.f32 %v524, %v761
    %v806 = vadd.f32 %v527, %v764
    %v807 = vadd.f32 %v532, %v769
    %v808 = vadd.f32 %v535, %v772
    %v809 = vadd.f32 %v540, %v777
    %v810 = vadd.f32 %v543, %v780
    %v811 = vadd.f32 %v548, %v785
    %v812 = vadd.f32 %v551, %v788
    %v813 = vadd.f32 %v556, %v793
    %v814 = vadd.f32 %v559, %v796
    %v815 = vld [vmem:[%s0 + $0x8] sm:$0x3]
    %v816 = vld [vmem:[%s0 + $0x18] sm:$0x3]
    %v817 = vld [vmem:[%s0 + $0x28] sm:$0x3]
    %v818 = vld [vmem:[%s0 + $0x38] sm:$0x3]
    %v819 = vld [vmem:[%s0 + $0x48] sm:$0x3]
    %v820 = vld [vmem:[%s0 + $0x58] sm:$0x3]
    %v821 = vld [vmem:[%s0 + $0x68] sm:$0x3]
    %v822 = vld [vmem:[%s0 + $0x78] sm:$0x3]
    %vm823 = vsmask.f32 2304
    %vm824 = vsmask.f32 6416
    %vm825 = vmor %vm823, %vm824
    %v827 = vshrl.u32 %v562, 16
    %v829 = vrot.slane %v827, 5
    %v830 = vshll.u32 %v562, 16
    %v832 = vrot.slane %v830, 6
    %v833 = vor.u32 %v829, %v832
    %v834 = vrot.slane %v833, 4
    %v835 = vrot.slane %v62, 5
    %v836 = vrot.slane %v58, 6
    %v837 = vor.u32 %v835, %v836
    %v838 = vsel %vm825, %v834, %v837
    %v839 = vrot.slane %v837, 4
    %v841 = vshrl.u32 %v815, 16
    %v843 = vrot.slane %v841, 5
    %v844 = vshll.u32 %v815, 16
    %v846 = vrot.slane %v844, 6
    %v847 = vor.u32 %v843, %v846
    %v848 = vsel %vm825, %v839, %v847
    %v850 = vshrl.u32 %v563, 16
    %v852 = vrot.slane %v850, 5
    %v853 = vshll.u32 %v563, 16
    %v855 = vrot.slane %v853, 6
    %v856 = vor.u32 %v852, %v855
    %v857 = vrot.slane %v856, 4
    %v858 = vrot.slane %v86, 5
    %v859 = vrot.slane %v82, 6
    %v860 = vor.u32 %v858, %v859
    %v861 = vsel %vm825, %v857, %v860
    %v862 = vrot.slane %v860, 4
    %v864 = vshrl.u32 %v816, 16
    %v866 = vrot.slane %v864, 5
    %v867 = vshll.u32 %v816, 16
    %v869 = vrot.slane %v867, 6
    %v870 = vor.u32 %v866, %v869
    %v871 = vsel %vm825, %v862, %v870
    %v873 = vshrl.u32 %v564, 16
    %v875 = vrot.slane %v873, 5
    %v876 = vshll.u32 %v564, 16
    %v878 = vrot.slane %v876, 6
    %v879 = vor.u32 %v875, %v878
    %v880 = vrot.slane %v879, 4
    %v881 = vrot.slane %v110, 5
    %v882 = vrot.slane %v106, 6
    %v883 = vor.u32 %v881, %v882
    %v884 = vsel %vm825, %v880, %v883
    %v885 = vrot.slane %v883, 4
    %v887 = vshrl.u32 %v817, 16
    %v889 = vrot.slane %v887, 5
    %v890 = vshll.u32 %v817, 16
    %v892 = vrot.slane %v890, 6
    %v893 = vor.u32 %v889, %v892
    %v894 = vsel %vm825, %v885, %v893
    %v896 = vshrl.u32 %v565, 16
    %v898 = vrot.slane %v896, 5
    %v899 = vshll.u32 %v565, 16
    %v901 = vrot.slane %v899, 6
    %v902 = vor.u32 %v898, %v901
    %v903 = vrot.slane %v902, 4
    %v904 = vrot.slane %v134, 5
    %v905 = vrot.slane %v130, 6
    %v906 = vor.u32 %v904, %v905
    %v907 = vsel %vm825, %v903, %v906
    %v908 = vrot.slane %v906, 4
    %v910 = vshrl.u32 %v818, 16
    %v912 = vrot.slane %v910, 5
    %v913 = vshll.u32 %v818, 16
    %v915 = vrot.slane %v913, 6
    %v916 = vor.u32 %v912, %v915
    %v917 = vsel %vm825, %v908, %v916
    %v919 = vshrl.u32 %v566, 16
    %v921 = vrot.slane %v919, 5
    %v922 = vshll.u32 %v566, 16
    %v924 = vrot.slane %v922, 6
    %v925 = vor.u32 %v921, %v924
    %v926 = vrot.slane %v925, 4
    %v927 = vrot.slane %v158, 5
    %v928 = vrot.slane %v154, 6
    %v929 = vor.u32 %v927, %v928
    %v930 = vsel %vm825, %v926, %v929
    %v931 = vrot.slane %v929, 4
    %v933 = vshrl.u32 %v819, 16
    %v935 = vrot.slane %v933, 5
    %v936 = vshll.u32 %v819, 16
    %v938 = vrot.slane %v936, 6
    %v939 = vor.u32 %v935, %v938
    %v940 = vsel %vm825, %v931, %v939
    %v942 = vshrl.u32 %v567, 16
    %v944 = vrot.slane %v942, 5
    %v945 = vshll.u32 %v567, 16
    %v947 = vrot.slane %v945, 6
    %v948 = vor.u32 %v944, %v947
    %v949 = vrot.slane %v948, 4
    %v950 = vrot.slane %v182, 5
    %v951 = vrot.slane %v178, 6
    %v952 = vor.u32 %v950, %v951
    %v953 = vsel %vm825, %v949, %v952
    %v954 = vrot.slane %v952, 4
    %v956 = vshrl.u32 %v820, 16
    %v958 = vrot.slane %v956, 5
    %v959 = vshll.u32 %v820, 16
    %v961 = vrot.slane %v959, 6
    %v962 = vor.u32 %v958, %v961
    %v963 = vsel %vm825, %v954, %v962
    %v965 = vshrl.u32 %v568, 16
    %v967 = vrot.slane %v965, 5
    %v968 = vshll.u32 %v568, 16
    %v970 = vrot.slane %v968, 6
    %v971 = vor.u32 %v967, %v970
    %v972 = vrot.slane %v971, 4
    %v973 = vrot.slane %v206, 5
    %v974 = vrot.slane %v202, 6
    %v975 = vor.u32 %v973, %v974
    %v976 = vsel %vm825, %v972, %v975
    %v977 = vrot.slane %v975, 4
    %v979 = vshrl.u32 %v821, 16
    %v981 = vrot.slane %v979, 5
    %v982 = vshll.u32 %v821, 16
    %v984 = vrot.slane %v982, 6
    %v985 = vor.u32 %v981, %v984
    %v986 = vsel %vm825, %v977, %v985
    %v988 = vshrl.u32 %v569, 16
    %v990 = vrot.slane %v988, 5
    %v991 = vshll.u32 %v569, 16
    %v993 = vrot.slane %v991, 6
    %v994 = vor.u32 %v990, %v993
    %v995 = vrot.slane %v994, 4
    %v996 = vrot.slane %v230, 5
    %v997 = vrot.slane %v226, 6
    %v998 = vor.u32 %v996, %v997
    %v999 = vsel %vm825, %v995, %v998
    %v1000 = vrot.slane %v998, 4
    %v1002 = vshrl.u32 %v822, 16
    %v1004 = vrot.slane %v1002, 5
    %v1005 = vshll.u32 %v822, 16
    %v1007 = vrot.slane %v1005, 6
    %v1008 = vor.u32 %v1004, %v1007
    %v1009 = vsel %vm825, %v1000, %v1008
    %s1010 = scalar_lea.vmem %s2, 24
    %v1011 = vld [vmem:[%s1010] sm:$0xf]
    %v1012 = vld [vmem:[%s1010 + $0x4] sm:$0xf]
    %v1013 = vunpack.c.l.b16 %v838
    %v1014 = vunpack.c.l.b16 %v848
    %v1015 = vunpack.c.l.b16 %v861
    %v1016 = vunpack.c.l.b16 %v871
    %v1017 = vunpack.c.l.b16 %v884
    %v1018 = vunpack.c.l.b16 %v894
    %v1019 = vunpack.c.l.b16 %v907
    %v1020 = vunpack.c.l.b16 %v917
    %v1021 = vunpack.c.l.b16 %v930
    %v1022 = vunpack.c.l.b16 %v940
    %v1023 = vunpack.c.l.b16 %v953
    %v1024 = vunpack.c.l.b16 %v963
    %v1025 = vunpack.c.l.b16 %v976
    %v1026 = vunpack.c.l.b16 %v986
    %v1027 = vunpack.c.l.b16 %v999
    %v1028 = vunpack.c.l.b16 %v1009
    %v1029 = vpack.c.b16 %v1014, %v1013
    %v1030 = vpack.c.b16 %v1016, %v1015
    %v1031 = vpack.c.b16 %v1018, %v1017
    %v1032 = vpack.c.b16 %v1020, %v1019
    %v1033 = vpack.c.b16 %v1022, %v1021
    %v1034 = vpack.c.b16 %v1024, %v1023
    %v1035 = vpack.c.b16 %v1026, %v1025
    %v1036 = vpack.c.b16 %v1028, %v1027
    %v1039 = vunpack.c.l.b16 %v1011
    %v1040 = vunpack.c.l.b16 %v1012
    %v1041 = vpack.c.b16 %v1040, %v1039
    %v1044 = vsel %vm273, %v1029, 0
    %v1047 = vsel %vm273, %v1030, 0
    %v1050 = vsel %vm273, %v1031, 0
    %v1053 = vsel %vm273, %v1032, 0
    %v1056 = vsel %vm273, %v1033, 0
    %v1059 = vsel %vm273, %v1034, 0
    %v1062 = vsel %vm273, %v1035, 0
    %v1065 = vsel %vm273, %v1036, 0
    %1067 = vmatprep.subr.bf16.mxu0 0
    %1068 = vmatpush1.bf16.msra.mxu0 0
    %1069 = vmatprep.subr.bf16.mxu0 0
    %1070 = vmatpush1.bf16.msra.mxu0 0
    %1071 = vmatprep.subr.bf16.mxu0 0
    %1072 = vmatpush1.bf16.msra.mxu0 0
    %1073 = vmatprep.subr.bf16.mxu0 0
    %1074 = vmatpush1.bf16.msra.mxu0 0
    %1075 = vmatprep.subr.bf16.mxu0 0
    %1076 = vmatpush1.bf16.msra.mxu0 0
    %1077 = vmatprep.subr.bf16.mxu0 0
    %1078 = vmatpush1.bf16.msra.mxu0 0
    %1079 = vmatprep.subr.bf16.mxu0 0
    %1080 = vmatpush1.bf16.msra.mxu0 0
    %1081 = vmatprep.subr.bf16.mxu0 0
    %1082 = vmatpush1.bf16.msra.mxu0 %v1041
    %1083 = vmatprep.subr.bf16.mxu0 0
    %1084 = vmatpush2.bf16.msra.mxu0 0
    %1085 = vmatprep.subr.bf16.mxu0 0
    %1086 = vmatpush2.bf16.msra.mxu0 0
    %1087 = vmatprep.subr.bf16.mxu0 0
    %1088 = vmatpush2.bf16.msra.mxu0 0
    %1089 = vmatprep.subr.bf16.mxu0 0
    %1090 = vmatpush2.bf16.msra.mxu0 0
    %1091 = vmatprep.subr.bf16.mxu0 0
    %1092 = vmatpush2.bf16.msra.mxu0 0
    %1093 = vmatprep.subr.bf16.mxu0 0
    %1094 = vmatpush2.bf16.msra.mxu0 0
    %1095 = vmatprep.subr.bf16.mxu0 0
    %1096 = vmatpush2.bf16.msra.mxu0 0
    %1097 = vmatprep.subr.bf16.mxu0 0
    %1098 = vmatpush2.bf16.msra.mxu0 0
    %1099 = vmatprep.mubr.bf16.mxu0 0
    %1100 = vmatmul.mubr.bf16.gmra.mxu0 %v1044
    %v1101 = vpop.f32.mrf.mxu0
    %v1102 = vadd.f32 0.0, %v1101
    %v1103 = vpop.f32.mrf.mxu0
    %v1104 = vpop.f32.mrf.mxu0
    %v1105 = vadd.f32 0.0, %v1104
    %v1106 = vpop.f32.mrf.mxu0
    %1107 = vmatprep.mubr.bf16.mxu0 0
    %1108 = vmatmul.mubr.bf16.gmra.mxu0 %v1047
    %v1109 = vpop.f32.mrf.mxu0
    %v1110 = vadd.f32 0.0, %v1109
    %v1111 = vpop.f32.mrf.mxu0
    %v1112 = vpop.f32.mrf.mxu0
    %v1113 = vadd.f32 0.0, %v1112
    %v1114 = vpop.f32.mrf.mxu0
    %1115 = vmatprep.mubr.bf16.mxu0 0
    %1116 = vmatmul.mubr.bf16.gmra.mxu0 %v1050
    %v1117 = vpop.f32.mrf.mxu0
    %v1118 = vadd.f32 0.0, %v1117
    %v1119 = vpop.f32.mrf.mxu0
    %v1120 = vpop.f32.mrf.mxu0
    %v1121 = vadd.f32 0.0, %v1120
    %v1122 = vpop.f32.mrf.mxu0
    %1123 = vmatprep.mubr.bf16.mxu0 0
    %1124 = vmatmul.mubr.bf16.gmra.mxu0 %v1053
    %v1125 = vpop.f32.mrf.mxu0
    %v1126 = vadd.f32 0.0, %v1125
    %v1127 = vpop.f32.mrf.mxu0
    %v1128 = vpop.f32.mrf.mxu0
    %v1129 = vadd.f32 0.0, %v1128
    %v1130 = vpop.f32.mrf.mxu0
    %1131 = vmatprep.mubr.bf16.mxu0 0
    %1132 = vmatmul.mubr.bf16.gmra.mxu0 %v1056
    %v1133 = vpop.f32.mrf.mxu0
    %v1134 = vadd.f32 0.0, %v1133
    %v1135 = vpop.f32.mrf.mxu0
    %v1136 = vpop.f32.mrf.mxu0
    %v1137 = vadd.f32 0.0, %v1136
    %v1138 = vpop.f32.mrf.mxu0
    %1139 = vmatprep.mubr.bf16.mxu0 0
    %1140 = vmatmul.mubr.bf16.gmra.mxu0 %v1059
    %v1141 = vpop.f32.mrf.mxu0
    %v1142 = vadd.f32 0.0, %v1141
    %v1143 = vpop.f32.mrf.mxu0
    %v1144 = vpop.f32.mrf.mxu0
    %v1145 = vadd.f32 0.0, %v1144
    %v1146 = vpop.f32.mrf.mxu0
    %1147 = vmatprep.mubr.bf16.mxu0 0
    %1148 = vmatmul.mubr.bf16.gmra.mxu0 %v1062
    %v1149 = vpop.f32.mrf.mxu0
    %v1150 = vadd.f32 0.0, %v1149
    %v1151 = vpop.f32.mrf.mxu0
    %v1152 = vpop.f32.mrf.mxu0
    %v1153 = vadd.f32 0.0, %v1152
    %v1154 = vpop.f32.mrf.mxu0
    %1155 = vmatprep.mubr.bf16.mxu0 0
    %1156 = vmatmul.mubr.bf16.gmra.mxu0 %v1065
    %v1157 = vpop.f32.mrf.mxu0
    %v1158 = vadd.f32 0.0, %v1157
    %v1159 = vpop.f32.mrf.mxu0
    %v1160 = vpop.f32.mrf.mxu0
    %v1161 = vadd.f32 0.0, %v1160
    %v1162 = vpop.f32.mrf.mxu0
    %1163 = vdwg.mxu0
    %v1164 = vadd.f32 %v799, %v1102
    %v1165 = vadd.f32 %v800, %v1105
    %v1166 = vadd.f32 %v801, %v1110
    %v1167 = vadd.f32 %v802, %v1113
    %v1168 = vadd.f32 %v803, %v1118
    %v1169 = vadd.f32 %v804, %v1121
    %v1170 = vadd.f32 %v805, %v1126
    %v1171 = vadd.f32 %v806, %v1129
    %v1172 = vadd.f32 %v807, %v1134
    %v1173 = vadd.f32 %v808, %v1137
    %v1174 = vadd.f32 %v809, %v1142
    %v1175 = vadd.f32 %v810, %v1145
    %v1176 = vadd.f32 %v811, %v1150
    %v1177 = vadd.f32 %v812, %v1153
    %v1178 = vadd.f32 %v813, %v1158
    %v1179 = vadd.f32 %v814, %v1161
    %v1180 = vld [vmem:[%s3] sm:$0x1]
    %v1182 = vlaneseq
    %v1183 = vshrl.u32 %v1182, 7
    %v1184 = vsub.s32 0, %v1183
    %v1185 = vrot.slane %v1180, %v1184
    %v1187 = vadd.f32 %v1164, %v1185
    %v1188 = vadd.f32 %v1165, %v1185
    %v1189 = vadd.f32 %v1166, %v1185
    %v1190 = vadd.f32 %v1167, %v1185
    %v1191 = vadd.f32 %v1168, %v1185
    %v1192 = vadd.f32 %v1169, %v1185
    %v1193 = vadd.f32 %v1170, %v1185
    %v1194 = vadd.f32 %v1171, %v1185
    %v1195 = vadd.f32 %v1172, %v1185
    %v1196 = vadd.f32 %v1173, %v1185
    %v1197 = vadd.f32 %v1174, %v1185
    %v1198 = vadd.f32 %v1175, %v1185
    %v1199 = vadd.f32 %v1176, %v1185
    %v1200 = vadd.f32 %v1177, %v1185
    %v1201 = vadd.f32 %v1178, %v1185
    %v1202 = vadd.f32 %v1179, %v1185
    %v1203 = vmax.f32 %v1187, 0.0
    %v1204 = vmax.f32 %v1188, 0.0
    %v1205 = vmax.f32 %v1189, 0.0
    %v1206 = vmax.f32 %v1190, 0.0
    %v1207 = vmax.f32 %v1191, 0.0
    %v1208 = vmax.f32 %v1192, 0.0
    %v1209 = vmax.f32 %v1193, 0.0
    %v1210 = vmax.f32 %v1194, 0.0
    %v1211 = vmax.f32 %v1195, 0.0
    %v1212 = vmax.f32 %v1196, 0.0
    %v1213 = vmax.f32 %v1197, 0.0
    %v1214 = vmax.f32 %v1198, 0.0
    %v1215 = vmax.f32 %v1199, 0.0
    %v1216 = vmax.f32 %v1200, 0.0
    %v1217 = vmax.f32 %v1201, 0.0
    %v1218 = vmax.f32 %v1202, 0.0
    %v1219 = vld [vmem:[%s1] sm:$0xff]
    %v1220 = vld [vmem:[%s1 + $0x8] sm:$0xff]
    %v1221 = vld [vmem:[%s1 + $0x10] sm:$0xff]
    %v1222 = vld [vmem:[%s1 + $0x18] sm:$0xff]
    %v1223 = vld [vmem:[%s1 + $0x20] sm:$0xff]
    %v1224 = vld [vmem:[%s1 + $0x28] sm:$0xff]
    %v1225 = vld [vmem:[%s1 + $0x30] sm:$0xff]
    %v1226 = vld [vmem:[%s1 + $0x38] sm:$0xff]
    %v1227 = vld [vmem:[%s1 + $0x40] sm:$0xff]
    %v1228 = vld [vmem:[%s1 + $0x48] sm:$0xff]
    %v1229 = vld [vmem:[%s1 + $0x50] sm:$0xff]
    %v1230 = vld [vmem:[%s1 + $0x58] sm:$0xff]
    %v1231 = vld [vmem:[%s1 + $0x60] sm:$0xff]
    %v1232 = vld [vmem:[%s1 + $0x68] sm:$0xff]
    %v1233 = vld [vmem:[%s1 + $0x70] sm:$0xff]
    %v1234 = vld [vmem:[%s1 + $0x78] sm:$0xff]
    %1236 = vset.pattern.permute.xlu0 0
    %1237 = vperm.xlu0 %1236, %v1219
    %v1238 = vpop.permute.xlu0 %1237
    %1241 = vset.pattern.permute.xlu0 0
    %1242 = vperm.xlu0 %1241, %v1220
    %v1243 = vpop.permute.xlu0 %1242
    %1246 = vset.pattern.permute.xlu0 0
    %1247 = vperm.xlu0 %1246, %v1221
    %v1248 = vpop.permute.xlu0 %1247
    %1251 = vset.pattern.permute.xlu0 0
    %1252 = vperm.xlu0 %1251, %v1222
    %v1253 = vpop.permute.xlu0 %1252
    %1256 = vset.pattern.permute.xlu0 0
    %1257 = vperm.xlu0 %1256, %v1223
    %v1258 = vpop.permute.xlu0 %1257
    %1261 = vset.pattern.permute.xlu0 0
    %1262 = vperm.xlu0 %1261, %v1224
    %v1263 = vpop.permute.xlu0 %1262
    %1266 = vset.pattern.permute.xlu0 0
    %1267 = vperm.xlu0 %1266, %v1225
    %v1268 = vpop.permute.xlu0 %1267
    %1271 = vset.pattern.permute.xlu0 0
    %1272 = vperm.xlu0 %1271, %v1226
    %v1273 = vpop.permute.xlu0 %1272
    %1276 = vset.pattern.permute.xlu0 0
    %1277 = vperm.xlu0 %1276, %v1227
    %v1278 = vpop.permute.xlu0 %1277
    %1281 = vset.pattern.permute.xlu0 0
    %1282 = vperm.xlu0 %1281, %v1228
    %v1283 = vpop.permute.xlu0 %1282
    %1286 = vset.pattern.permute.xlu0 0
    %1287 = vperm.xlu0 %1286, %v1229
    %v1288 = vpop.permute.xlu0 %1287
    %1291 = vset.pattern.permute.xlu0 0
    %1292 = vperm.xlu0 %1291, %v1230
    %v1293 = vpop.permute.xlu0 %1292
    %1296 = vset.pattern.permute.xlu0 0
    %1297 = vperm.xlu0 %1296, %v1231
    %v1298 = vpop.permute.xlu0 %1297
    %1301 = vset.pattern.permute.xlu0 0
    %1302 = vperm.xlu0 %1301, %v1232
    %v1303 = vpop.permute.xlu0 %1302
    %1306 = vset.pattern.permute.xlu0 0
    %1307 = vperm.xlu0 %1306, %v1233
    %v1308 = vpop.permute.xlu0 %1307
    %1311 = vset.pattern.permute.xlu0 0
    %1312 = vperm.xlu0 %1311, %v1234
    %v1313 = vpop.permute.xlu0 %1312
    %v1315 = vmul.f32 %v1203, %v1238
    %v1316 = vmul.f32 %v1204, %v1243
    %v1317 = vmul.f32 %v1205, %v1248
    %v1318 = vmul.f32 %v1206, %v1253
    %v1319 = vmul.f32 %v1207, %v1258
    %v1320 = vmul.f32 %v1208, %v1263
    %v1321 = vmul.f32 %v1209, %v1268
    %v1322 = vmul.f32 %v1210, %v1273
    %v1323 = vmul.f32 %v1211, %v1278
    %v1324 = vmul.f32 %v1212, %v1283
    %v1325 = vmul.f32 %v1213, %v1288
    %v1326 = vmul.f32 %v1214, %v1293
    %v1327 = vmul.f32 %v1215, %v1298
    %v1328 = vmul.f32 %v1216, %v1303
    %v1329 = vmul.f32 %v1217, %v1308
    %v1330 = vmul.f32 %v1218, %v1313
    %vm1331 = vcmask 261120
    %v1332 = vsel %vm1331, %v1315, -inf
    %v1333 = vsel %vm1331, %v1316, -inf
    %v1334 = vmax.f32 %v1332, %v1333
    %v1335 = vrot.slane %v1334, 4
    %v1336 = vmax.f32 %v1334, %v1335
    %v1337 = vrot.slane %v1336, 2
    %v1338 = vmax.f32 %v1336, %v1337
    %v1339 = vrot.slane %v1338, 1
    %v1340 = vmax.f32 %v1338, %v1339
    %v1341 = vsel %vm1331, %v1317, -inf
    %v1342 = vsel %vm1331, %v1318, -inf
    %v1343 = vmax.f32 %v1341, %v1342
    %v1344 = vrot.slane %v1343, 4
    %v1345 = vmax.f32 %v1343, %v1344
    %v1346 = vrot.slane %v1345, 2
    %v1347 = vmax.f32 %v1345, %v1346
    %v1348 = vrot.slane %v1347, 1
    %v1349 = vmax.f32 %v1347, %v1348
    %v1350 = vsel %vm1331, %v1319, -inf
    %v1351 = vsel %vm1331, %v1320, -inf
    %v1352 = vmax.f32 %v1350, %v1351
    %v1353 = vrot.slane %v1352, 4
    %v1354 = vmax.f32 %v1352, %v1353
    %v1355 = vrot.slane %v1354, 2
    %v1356 = vmax.f32 %v1354, %v1355
    %v1357 = vrot.slane %v1356, 1
    %v1358 = vmax.f32 %v1356, %v1357
    %v1359 = vsel %vm1331, %v1321, -inf
    %v1360 = vsel %vm1331, %v1322, -inf
    %v1361 = vmax.f32 %v1359, %v1360
    %v1362 = vrot.slane %v1361, 4
    %v1363 = vmax.f32 %v1361, %v1362
    %v1364 = vrot.slane %v1363, 2
    %v1365 = vmax.f32 %v1363, %v1364
    %v1366 = vrot.slane %v1365, 1
    %v1367 = vmax.f32 %v1365, %v1366
    %v1368 = vsel %vm1331, %v1323, -inf
    %v1369 = vsel %vm1331, %v1324, -inf
    %v1370 = vmax.f32 %v1368, %v1369
    %v1371 = vrot.slane %v1370, 4
    %v1372 = vmax.f32 %v1370, %v1371
    %v1373 = vrot.slane %v1372, 2
    %v1374 = vmax.f32 %v1372, %v1373
    %v1375 = vrot.slane %v1374, 1
    %v1376 = vmax.f32 %v1374, %v1375
    %v1377 = vsel %vm1331, %v1325, -inf
    %v1378 = vsel %vm1331, %v1326, -inf
    %v1379 = vmax.f32 %v1377, %v1378
    %v1380 = vrot.slane %v1379, 4
    %v1381 = vmax.f32 %v1379, %v1380
    %v1382 = vrot.slane %v1381, 2
    %v1383 = vmax.f32 %v1381, %v1382
    %v1384 = vrot.slane %v1383, 1
    %v1385 = vmax.f32 %v1383, %v1384
    %v1386 = vsel %vm1331, %v1327, -inf
    %v1387 = vsel %vm1331, %v1328, -inf
    %v1388 = vmax.f32 %v1386, %v1387
    %v1389 = vrot.slane %v1388, 4
    %v1390 = vmax.f32 %v1388, %v1389
    %v1391 = vrot.slane %v1390, 2
    %v1392 = vmax.f32 %v1390, %v1391
    %v1393 = vrot.slane %v1392, 1
    %v1394 = vmax.f32 %v1392, %v1393
    %v1395 = vsel %vm1331, %v1329, -inf
    %v1396 = vsel %vm1331, %v1330, -inf
    %v1397 = vmax.f32 %v1395, %v1396
    %v1398 = vrot.slane %v1397, 4
    %v1399 = vmax.f32 %v1397, %v1398
    %v1400 = vrot.slane %v1399, 2
    %v1401 = vmax.f32 %v1399, %v1400
    %v1402 = vrot.slane %v1401, 1
    %v1403 = vmax.f32 %v1401, %v1402
    %vm1412 = vcmask 1041409
    %v1413 = vsel %vm1412, %v1349, %v1340
    %vm1414 = vcmask 1042434
    %v1415 = vsel %vm1414, %v1358, %v1413
    %vm1416 = vcmask 1043459
    %v1417 = vsel %vm1416, %v1367, %v1415
    %vm1418 = vcmask 1044484
    %v1419 = vsel %vm1418, %v1376, %v1417
    %vm1420 = vcmask 1045509
    %v1421 = vsel %vm1420, %v1385, %v1419
    %vm1422 = vcmask 1046534
    %v1423 = vsel %vm1422, %v1394, %v1421
    %vm1424 = vcmask 1047559
    %v1425 = vsel %vm1424, %v1403, %v1423
    %1427 = vst.msk [vmem:[#allocation2] sm:$0xff] %vm1331, %v1425
    // Predicated region
    $region18: #{tpu_custom_call.1} parent=1 // pred_check
      _
    $region19: #{tpu_custom_call.1} parent=1 // pred_check_branch
      %1429 = sbr.rel (0) target = $region21
    $region20: #{tpu_custom_call.1} parent=1 // pred_region
      %s1431 = ssub.s32 128, 128
      %1432 = vsyncadd [#allocation3], %s1431
      %s1434 = sshll.u32 [#allocation2], 4
      %s1435 = int_to_ptr.vmem [resolvable:$true] %s1434
      %1437 = dma.vmem_to_hbm [thread:$0]  %s1435, 128, %s4, [#allocation3]
    $region21: #{tpu_custom_call.1} parent=1 // pred_fallthru
      _
    // Predicated region
    $region22: #{tpu_custom_call.1} parent=1 // pred_check
      _
    $region23: #{tpu_custom_call.1} parent=1 // pred_check_branch
      %1439 = sbr.rel (0) target = $region25
    $region24: #{tpu_custom_call.1} parent=1 // pred_region
      %1440 = dma.done [#allocation3], 128
    $region25: #{tpu_custom_call.1} parent=1 // pred_fallthru
      _
    %1441 = vsyncpa [#allocation3], 1

// kernel: tpu_custom_call.1
$region0: #{tpu_custom_call.1}
  #allocation0 [shape = 'u32[]', space=smem, size = 0x4, offset = 0x4, fixed_abs, tag = 'smem constant byte address 0x4 - core index']
  #allocation1 [shape = 'u32[144,128]{1,0:T(1,128)}', space=vmem, size = 0x12000, scoped, tag = 'internal scratch']
  %s0 = inlined_call_operand.vmem [shape: bf16[8,32,16], index: 0, kind: input, shape index: {}]
  %s1 = inlined_call_operand.vmem [shape: f32[128,1], index: 1, kind: input, shape index: {}]
  %s2 = inlined_call_operand.vmem [shape: bf16[4,16,32], index: 2, kind: input, shape index: {}]
  %s3 = inlined_call_operand.vmem [shape: f32[1,32], index: 3, kind: input, shape index: {}]
  %s4 = inlined_call_operand.hbm [shape: f32[8,32], index: 4, kind: output, shape index: {}]
  %s5 = sld [smem:[#allocation0]]
  $region26: #{tpu_custom_call.1} parent=0
    _
  %s7 = ssub.s32 1, %s5
  %s8 = scalar_select 0, %s7, %s5
  $region1: #{tpu_custom_call.1} parent=0
    #allocation2 [shape = 'u8[4096]{0}', space=vmem, size = 0x1000, scoped, tag = 'output window, operand 0, single buffered']
    #allocation3 [shape = 's32[1]{0}', space=sflag, size = 0x4, scoped, tag = 'scoped memory for tpu_custom_call.1']
    %9 = vsyncpa [#allocation3], 0
    // Predicated region
    $region2: #{tpu_custom_call.1} parent=1 // pred_check
      _
    $region3: #{tpu_custom_call.1} parent=1 // pred_check_branch
      %11 = sbr.rel (0) target = $region5
    $region4: #{tpu_custom_call.1} parent=1 // pred_region
      _
    $region5: #{tpu_custom_call.1} parent=1 // pred_fallthru
      _
    // Predicated region
    $region6: #{tpu_custom_call.1} parent=1 // pred_check
      _
    $region7: #{tpu_custom_call.1} parent=1 // pred_check_branch
      %13 = sbr.rel (0) target = $region9
    $region8: #{tpu_custom_call.1} parent=1 // pred_region
      _
    $region9: #{tpu_custom_call.1} parent=1 // pred_fallthru
      _
    // Predicated region
    $region10: #{tpu_custom_call.1} parent=1 // pred_check
      _
    $region11: #{tpu_custom_call.1} parent=1 // pred_check_branch
      %15 = sbr.rel (0) target = $region13
    $region12: #{tpu_custom_call.1} parent=1 // pred_region
      _
    $region13: #{tpu_custom_call.1} parent=1 // pred_fallthru
      _
    // Predicated region
    $region14: #{tpu_custom_call.1} parent=1 // pred_check
      _
    $region15: #{tpu_custom_call.1} parent=1 // pred_check_branch
      %17 = sbr.rel (0) target = $region17
    $region16: #{tpu_custom_call.1} parent=1 // pred_region
      _
    $region17: #{tpu_custom_call.1} parent=1 // pred_fallthru
      _
    %v19 = vld [vmem:[%s0] sm:$0xf]
    %v20 = vld [vmem:[%s0 + $0x4] sm:$0xf]
    %v21 = vld [vmem:[%s0 + $0x10] sm:$0xf]
    %v22 = vld [vmem:[%s0 + $0x14] sm:$0xf]
    %v23 = vld [vmem:[%s0 + $0x20] sm:$0xf]
    %v24 = vld [vmem:[%s0 + $0x24] sm:$0xf]
    %v25 = vld [vmem:[%s0 + $0x30] sm:$0xf]
    %v26 = vld [vmem:[%s0 + $0x34] sm:$0xf]
    %v27 = vld [vmem:[%s0 + $0x40] sm:$0xf]
    %v28 = vld [vmem:[%s0 + $0x44] sm:$0xf]
    %v29 = vld [vmem:[%s0 + $0x50] sm:$0xf]
    %v30 = vld [vmem:[%s0 + $0x54] sm:$0xf]
    %v31 = vld [vmem:[%s0 + $0x60] sm:$0xf]
    %v32 = vld [vmem:[%s0 + $0x64] sm:$0xf]
    %v33 = vld [vmem:[%s0 + $0x70] sm:$0xf]
    %v34 = vld [vmem:[%s0 + $0x74] sm:$0xf]
    %v35 = vld [vmem:[%s2] sm:$0xf]
    %v36 = vld [vmem:[%s2 + $0x4] sm:$0xf]
    %v37 = vld [vmem:[%s0 + $0x8] sm:$0x1]
    %v38 = vld [vmem:[%s0 + $0x18] sm:$0x1]
    %v39 = vld [vmem:[%s0 + $0x28] sm:$0x1]
    %v40 = vld [vmem:[%s0 + $0x38] sm:$0x1]
    %v41 = vld [vmem:[%s0 + $0x48] sm:$0x1]
    %v42 = vld [vmem:[%s0 + $0x58] sm:$0x1]
    %v43 = vld [vmem:[%s0 + $0x68] sm:$0x1]
    %v44 = vld [vmem:[%s0 + $0x78] sm:$0x1]
    %vm45 = vsmask.f32 3328
    %vm46 = vsmask.f32 7440
    %vm47 = vmor %vm45, %vm46
    %v49 = vshrl.u32 %v19, 16
    %v51 = vrot.slane %v49, 4
    %v52 = vshll.u32 %v19, 16
    %v54 = vrot.slane %v52, 5
    %v55 = vor.u32 %v51, %v54
    %v56 = vrot.slane %v55, 4
    %v58 = vshll.u32 %v20, 16
    %v60 = vrot.slane %v58, 5
    %v61 = vsel %vm47, %v56, %v60
    %v62 = vshrl.u32 %v20, 16
    %v64 = vrot.slane %v62, 4
    %v65 = vor.u32 %v64, %v60
    %v66 = vrot.slane %v65, 4
    %v68 = vshll.u32 %v37, 16
    %v70 = vrot.slane %v68, 5
    %v71 = vsel %vm47, %v66, %v70
    %v73 = vshrl.u32 %v21, 16
    %v75 = vrot.slane %v73, 4
    %v76 = vshll.u32 %v21, 16
    %v78 = vrot.slane %v76, 5
    %v79 = vor.u32 %v75, %v78
    %v80 = vrot.slane %v79, 4
    %v82 = vshll.u32 %v22, 16
    %v84 = vrot.slane %v82, 5
    %v85 = vsel %vm47, %v80, %v84
    %v86 = vshrl.u32 %v22, 16
    %v88 = vrot.slane %v86, 4
    %v89 = vor.u32 %v88, %v84
    %v90 = vrot.slane %v89, 4
    %v92 = vshll.u32 %v38, 16
    %v94 = vrot.slane %v92, 5
    %v95 = vsel %vm47, %v90, %v94
    %v97 = vshrl.u32 %v23, 16
    %v99 = vrot.slane %v97, 4
    %v100 = vshll.u32 %v23, 16
    %v102 = vrot.slane %v100, 5
    %v103 = vor.u32 %v99, %v102
    %v104 = vrot.slane %v103, 4
    %v106 = vshll.u32 %v24, 16
    %v108 = vrot.slane %v106, 5
    %v109 = vsel %vm47, %v104, %v108
    %v110 = vshrl.u32 %v24, 16
    %v112 = vrot.slane %v110, 4
    %v113 = vor.u32 %v112, %v108
    %v114 = vrot.slane %v113, 4
    %v116 = vshll.u32 %v39, 16
    %v118 = vrot.slane %v116, 5
    %v119 = vsel %vm47, %v114, %v118
    %v121 = vshrl.u32 %v25, 16
    %v123 = vrot.slane %v121, 4
    %v124 = vshll.u32 %v25, 16
    %v126 = vrot.slane %v124, 5
    %v127 = vor.u32 %v123, %v126
    %v128 = vrot.slane %v127, 4
    %v130 = vshll.u32 %v26, 16
    %v132 = vrot.slane %v130, 5
    %v133 = vsel %vm47, %v128, %v132
    %v134 = vshrl.u32 %v26, 16
    %v136 = vrot.slane %v134, 4
    %v137 = vor.u32 %v136, %v132
    %v138 = vrot.slane %v137, 4
    %v140 = vshll.u32 %v40, 16
    %v142 = vrot.slane %v140, 5
    %v143 = vsel %vm47, %v138, %v142
    %v145 = vshrl.u32 %v27, 16
    %v147 = vrot.slane %v145, 4
    %v148 = vshll.u32 %v27, 16
    %v150 = vrot.slane %v148, 5
    %v151 = vor.u32 %v147, %v150
    %v152 = vrot.slane %v151, 4
    %v154 = vshll.u32 %v28, 16
    %v156 = vrot.slane %v154, 5
    %v157 = vsel %vm47, %v152, %v156
    %v158 = vshrl.u32 %v28, 16
    %v160 = vrot.slane %v158, 4
    %v161 = vor.u32 %v160, %v156
    %v162 = vrot.slane %v161, 4
    %v164 = vshll.u32 %v41, 16
    %v166 = vrot.slane %v164, 5
    %v167 = vsel %vm47, %v162, %v166
    %v169 = vshrl.u32 %v29, 16
    %v171 = vrot.slane %v169, 4
    %v172 = vshll.u32 %v29, 16
    %v174 = vrot.slane %v172, 5
    %v175 = vor.u32 %v171, %v174
    %v176 = vrot.slane %v175, 4
    %v178 = vshll.u32 %v30, 16
    %v180 = vrot.slane %v178, 5
    %v181 = vsel %vm47, %v176, %v180
    %v182 = vshrl.u32 %v30, 16
    %v184 = vrot.slane %v182, 4
    %v185 = vor.u32 %v184, %v180
    %v186 = vrot.slane %v185, 4
    %v188 = vshll.u32 %v42, 16
    %v190 = vrot.slane %v188, 5
    %v191 = vsel %vm47, %v186, %v190
    %v193 = vshrl.u32 %v31, 16
    %v195 = vrot.slane %v193, 4
    %v196 = vshll.u32 %v31, 16
    %v198 = vrot.slane %v196, 5
    %v199 = vor.u32 %v195, %v198
    %v200 = vrot.slane %v199, 4
    %v202 = vshll.u32 %v32, 16
    %v204 = vrot.slane %v202, 5
    %v205 = vsel %vm47, %v200, %v204
    %v206 = vshrl.u32 %v32, 16
    %v208 = vrot.slane %v206, 4
    %v209 = vor.u32 %v208, %v204
    %v210 = vrot.slane %v209, 4
    %v212 = vshll.u32 %v43, 16
    %v214 = vrot.slane %v212, 5
    %v215 = vsel %vm47, %v210, %v214
    %v217 = vshrl.u32 %v33, 16
    %v219 = vrot.slane %v217, 4
    %v220 = vshll.u32 %v33, 16
    %v222 = vrot.slane %v220, 5
    %v223 = vor.u32 %v219, %v222
    %v224 = vrot.slane %v223, 4
    %v226 = vshll.u32 %v34, 16
    %v228 = vrot.slane %v226, 5
    %v229 = vsel %vm47, %v224, %v228
    %v230 = vshrl.u32 %v34, 16
    %v232 = vrot.slane %v230, 4
    %v233 = vor.u32 %v232, %v228
    %v234 = vrot.slane %v233, 4
    %v236 = vshll.u32 %v44, 16
    %v238 = vrot.slane %v236, 5
    %v239 = vsel %vm47, %v234, %v238
    %s240 = scalar_lea.vmem %s2, 8
    %v241 = vld [vmem:[%s240] sm:$0xf]
    %v242 = vld [vmem:[%s240 + $0x4] sm:$0xf]
    %v243 = vunpack.c.l.b16 %v61
    %v244 = vunpack.c.l.b16 %v71
    %v245 = vunpack.c.l.b16 %v85
    %v246 = vunpack.c.l.b16 %v95
    %v247 = vunpack.c.l.b16 %v109
    %v248 = vunpack.c.l.b16 %v119
    %v249 = vunpack.c.l.b16 %v133
    %v250 = vunpack.c.l.b16 %v143
    %v251 = vunpack.c.l.b16 %v157
    %v252 = vunpack.c.l.b16 %v167
    %v253 = vunpack.c.l.b16 %v181
    %v254 = vunpack.c.l.b16 %v191
    %v255 = vunpack.c.l.b16 %v205
    %v256 = vunpack.c.l.b16 %v215
    %v257 = vunpack.c.l.b16 %v229
    %v258 = vunpack.c.l.b16 %v239
    %v259 = vpack.c.b16 %v244, %v243
    %v260 = vpack.c.b16 %v246, %v245
    %v261 = vpack.c.b16 %v248, %v247
    %v262 = vpack.c.b16 %v250, %v249
    %v263 = vpack.c.b16 %v252, %v251
    %v264 = vpack.c.b16 %v254, %v253
    %v265 = vpack.c.b16 %v256, %v255
    %v266 = vpack.c.b16 %v258, %v257
    %v269 = vunpack.c.l.b16 %v241
    %v270 = vunpack.c.l.b16 %v242
    %v271 = vpack.c.b16 %v270, %v269
    %vm273 = vcmask 130048
    %v275 = vsel %vm273, %v259, 0
    %v278 = vsel %vm273, %v260, 0
    %v281 = vsel %vm273, %v261, 0
    %v284 = vsel %vm273, %v262, 0
    %v287 = vsel %vm273, %v263, 0
    %v290 = vsel %vm273, %v264, 0
    %v293 = vsel %vm273, %v265, 0
    %v296 = vsel %vm273, %v266, 0
    %298 = vmatprep.subr.bf16.mxu0 0
    %299 = vmatpush1.bf16.msra.mxu0 0
    %300 = vmatprep.subr.bf16.mxu0 0
    %301 = vmatpush1.bf16.msra.mxu0 0
    %302 = vmatprep.subr.bf16.mxu0 0
    %303 = vmatpush1.bf16.msra.mxu0 0
    %304 = vmatprep.subr.bf16.mxu0 0
    %305 = vmatpush1.bf16.msra.mxu0 0
    %306 = vmatprep.subr.bf16.mxu0 0
    %307 = vmatpush1.bf16.msra.mxu0 0
    %308 = vmatprep.subr.bf16.mxu0 0
    %309 = vmatpush1.bf16.msra.mxu0 0
    %310 = vmatprep.subr.bf16.mxu0 0
    %311 = vmatpush1.bf16.msra.mxu0 0
    %312 = vmatprep.subr.bf16.mxu0 0
    %313 = vmatpush1.bf16.msra.mxu0 %v271
    %314 = vmatprep.subr.bf16.mxu0 0
    %315 = vmatpush2.bf16.msra.mxu0 0
    %316 = vmatprep.subr.bf16.mxu0 0
    %317 = vmatpush2.bf16.msra.mxu0 0
    %318 = vmatprep.subr.bf16.mxu0 0
    %319 = vmatpush2.bf16.msra.mxu0 0
    %320 = vmatprep.subr.bf16.mxu0 0
    %321 = vmatpush2.bf16.msra.mxu0 0
    %322 = vmatprep.subr.bf16.mxu0 0
    %323 = vmatpush2.bf16.msra.mxu0 0
    %324 = vmatprep.subr.bf16.mxu0 0
    %325 = vmatpush2.bf16.msra.mxu0 0
    %326 = vmatprep.subr.bf16.mxu0 0
    %327 = vmatpush2.bf16.msra.mxu0 0
    %328 = vmatprep.subr.bf16.mxu0 0
    %329 = vmatpush2.bf16.msra.mxu0 0
    %330 = vmatprep.mubr.bf16.mxu0 0
    %331 = vmatmul.mubr.bf16.gmra.mxu0 %v275
    %v332 = vpop.f32.mrf.mxu0
    %v333 = vadd.f32 0.0, %v332
    %v334 = vpop.f32.mrf.mxu0
    %v335 = vpop.f32.mrf.mxu0
    %v336 = vadd.f32 0.0, %v335
    %v337 = vpop.f32.mrf.mxu0
    %338 = vmatprep.mubr.bf16.mxu0 0
    %339 = vmatmul.mubr.bf16.gmra.mxu0 %v278
    %v340 = vpop.f32.mrf.mxu0
    %v341 = vadd.f32 0.0, %v340
    %v342 = vpop.f32.mrf.mxu0
    %v343 = vpop.f32.mrf.mxu0
    %v344 = vadd.f32 0.0, %v343
    %v345 = vpop.f32.mrf.mxu0
    %346 = vmatprep.mubr.bf16.mxu0 0
    %347 = vmatmul.mubr.bf16.gmra.mxu0 %v281
    %v348 = vpop.f32.mrf.mxu0
    %v349 = vadd.f32 0.0, %v348
    %v350 = vpop.f32.mrf.mxu0
    %v351 = vpop.f32.mrf.mxu0
    %v352 = vadd.f32 0.0, %v351
    %v353 = vpop.f32.mrf.mxu0
    %354 = vmatprep.mubr.bf16.mxu0 0
    %355 = vmatmul.mubr.bf16.gmra.mxu0 %v284
    %v356 = vpop.f32.mrf.mxu0
    %v357 = vadd.f32 0.0, %v356
    %v358 = vpop.f32.mrf.mxu0
    %v359 = vpop.f32.mrf.mxu0
    %v360 = vadd.f32 0.0, %v359
    %v361 = vpop.f32.mrf.mxu0
    %362 = vmatprep.mubr.bf16.mxu0 0
    %363 = vmatmul.mubr.bf16.gmra.mxu0 %v287
    %v364 = vpop.f32.mrf.mxu0
    %v365 = vadd.f32 0.0, %v364
    %v366 = vpop.f32.mrf.mxu0
    %v367 = vpop.f32.mrf.mxu0
    %v368 = vadd.f32 0.0, %v367
    %v369 = vpop.f32.mrf.mxu0
    %370 = vmatprep.mubr.bf16.mxu0 0
    %371 = vmatmul.mubr.bf16.gmra.mxu0 %v290
    %v372 = vpop.f32.mrf.mxu0
    %v373 = vadd.f32 0.0, %v372
    %v374 = vpop.f32.mrf.mxu0
    %v375 = vpop.f32.mrf.mxu0
    %v376 = vadd.f32 0.0, %v375
    %v377 = vpop.f32.mrf.mxu0
    %378 = vmatprep.mubr.bf16.mxu0 0
    %379 = vmatmul.mubr.bf16.gmra.mxu0 %v293
    %v380 = vpop.f32.mrf.mxu0
    %v381 = vadd.f32 0.0, %v380
    %v382 = vpop.f32.mrf.mxu0
    %v383 = vpop.f32.mrf.mxu0
    %v384 = vadd.f32 0.0, %v383
    %v385 = vpop.f32.mrf.mxu0
    %386 = vmatprep.mubr.bf16.mxu0 0
    %387 = vmatmul.mubr.bf16.gmra.mxu0 %v296
    %v388 = vpop.f32.mrf.mxu0
    %v389 = vadd.f32 0.0, %v388
    %v390 = vpop.f32.mrf.mxu0
    %v391 = vpop.f32.mrf.mxu0
    %v392 = vadd.f32 0.0, %v391
    %v393 = vpop.f32.mrf.mxu0
    %394 = vdwg.mxu0
    %v411 = vunpack.c.l.b16 %v19
    %v412 = vunpack.c.l.b16 %v20
    %v413 = vunpack.c.l.b16 %v21
    %v414 = vunpack.c.l.b16 %v22
    %v415 = vunpack.c.l.b16 %v23
    %v416 = vunpack.c.l.b16 %v24
    %v417 = vunpack.c.l.b16 %v25
    %v418 = vunpack.c.l.b16 %v26
    %v419 = vunpack.c.l.b16 %v27
    %v420 = vunpack.c.l.b16 %v28
    %v421 = vunpack.c.l.b16 %v29
    %v422 = vunpack.c.l.b16 %v30
    %v423 = vunpack.c.l.b16 %v31
    %v424 = vunpack.c.l.b16 %v32
    %v425 = vunpack.c.l.b16 %v33
    %v426 = vunpack.c.l.b16 %v34
    %v427 = vpack.c.b16 %v412, %v411
    %v428 = vpack.c.b16 %v414, %v413
    %v429 = vpack.c.b16 %v416, %v415
    %v430 = vpack.c.b16 %v418, %v417
    %v431 = vpack.c.b16 %v420, %v419
    %v432 = vpack.c.b16 %v422, %v421
    %v433 = vpack.c.b16 %v424, %v423
    %v434 = vpack.c.b16 %v426, %v425
    %v437 = vunpack.c.l.b16 %v35
    %v438 = vunpack.c.l.b16 %v36
    %v439 = vpack.c.b16 %v438, %v437
    %v442 = vsel %vm273, %v427, 0
    %v445 = vsel %vm273, %v428, 0
    %v448 = vsel %vm273, %v429, 0
    %v451 = vsel %vm273, %v430, 0
    %v454 = vsel %vm273, %v431, 0
    %v457 = vsel %vm273, %v432, 0
    %v460 = vsel %vm273, %v433, 0
    %v463 = vsel %vm273, %v434, 0
    %465 = vmatprep.subr.bf16.mxu0 0
    %466 = vmatpush1.bf16.msra.mxu0 0
    %467 = vmatprep.subr.bf16.mxu0 0
    %468 = vmatpush1.bf16.msra.mxu0 0
    %469 = vmatprep.subr.bf16.mxu0 0
    %470 = vmatpush1.bf16.msra.mxu0 0
    %471 = vmatprep.subr.bf16.mxu0 0
    %472 = vmatpush1.bf16.msra.mxu0 0
    %473 = vmatprep.subr.bf16.mxu0 0
    %474 = vmatpush1.bf16.msra.mxu0 0
    %475 = vmatprep.subr.bf16.mxu0 0
    %476 = vmatpush1.bf16.msra.mxu0 0
    %477 = vmatprep.subr.bf16.mxu0 0
    %478 = vmatpush1.bf16.msra.mxu0 0
    %479 = vmatprep.subr.bf16.mxu0 0
    %480 = vmatpush1.bf16.msra.mxu0 %v439
    %481 = vmatprep.subr.bf16.mxu0 0
    %482 = vmatpush2.bf16.msra.mxu0 0
    %483 = vmatprep.subr.bf16.mxu0 0
    %484 = vmatpush2.bf16.msra.mxu0 0
    %485 = vmatprep.subr.bf16.mxu0 0
    %486 = vmatpush2.bf16.msra.mxu0 0
    %487 = vmatprep.subr.bf16.mxu0 0
    %488 = vmatpush2.bf16.msra.mxu0 0
    %489 = vmatprep.subr.bf16.mxu0 0
    %490 = vmatpush2.bf16.msra.mxu0 0
    %491 = vmatprep.subr.bf16.mxu0 0
    %492 = vmatpush2.bf16.msra.mxu0 0
    %493 = vmatprep.subr.bf16.mxu0 0
    %494 = vmatpush2.bf16.msra.mxu0 0
    %495 = vmatprep.subr.bf16.mxu0 0
    %496 = vmatpush2.bf16.msra.mxu0 0
    %497 = vmatprep.mubr.bf16.mxu0 0
    %498 = vmatmul.mubr.bf16.gmra.mxu0 %v442
    %v499 = vpop.f32.mrf.mxu0
    %v500 = vadd.f32 %v333, %v499
    %v501 = vpop.f32.mrf.mxu0
    %v502 = vpop.f32.mrf.mxu0
    %v503 = vadd.f32 %v336, %v502
    %v504 = vpop.f32.mrf.mxu0
    %505 = vmatprep.mubr.bf16.mxu0 0
    %506 = vmatmul.mubr.bf16.gmra.mxu0 %v445
    %v507 = vpop.f32.mrf.mxu0
    %v508 = vadd.f32 %v341, %v507
    %v509 = vpop.f32.mrf.mxu0
    %v510 = vpop.f32.mrf.mxu0
    %v511 = vadd.f32 %v344, %v510
    %v512 = vpop.f32.mrf.mxu0
    %513 = vmatprep.mubr.bf16.mxu0 0
    %514 = vmatmul.mubr.bf16.gmra.mxu0 %v448
    %v515 = vpop.f32.mrf.mxu0
    %v516 = vadd.f32 %v349, %v515
    %v517 = vpop.f32.mrf.mxu0
    %v518 = vpop.f32.mrf.mxu0
    %v519 = vadd.f32 %v352, %v518
    %v520 = vpop.f32.mrf.mxu0
    %521 = vmatprep.mubr.bf16.mxu0 0
    %522 = vmatmul.mubr.bf16.gmra.mxu0 %v451
    %v523 = vpop.f32.mrf.mxu0
    %v524 = vadd.f32 %v357, %v523
    %v525 = vpop.f32.mrf.mxu0
    %v526 = vpop.f32.mrf.mxu0
    %v527 = vadd.f32 %v360, %v526
    %v528 = vpop.f32.mrf.mxu0
    %529 = vmatprep.mubr.bf16.mxu0 0
    %530 = vmatmul.mubr.bf16.gmra.mxu0 %v454
    %v531 = vpop.f32.mrf.mxu0
    %v532 = vadd.f32 %v365, %v531
    %v533 = vpop.f32.mrf.mxu0
    %v534 = vpop.f32.mrf.mxu0
    %v535 = vadd.f32 %v368, %v534
    %v536 = vpop.f32.mrf.mxu0
    %537 = vmatprep.mubr.bf16.mxu0 0
    %538 = vmatmul.mubr.bf16.gmra.mxu0 %v457
    %v539 = vpop.f32.mrf.mxu0
    %v540 = vadd.f32 %v373, %v539
    %v541 = vpop.f32.mrf.mxu0
    %v542 = vpop.f32.mrf.mxu0
    %v543 = vadd.f32 %v376, %v542
    %v544 = vpop.f32.mrf.mxu0
    %545 = vmatprep.mubr.bf16.mxu0 0
    %546 = vmatmul.mubr.bf16.gmra.mxu0 %v460
    %v547 = vpop.f32.mrf.mxu0
    %v548 = vadd.f32 %v381, %v547
    %v549 = vpop.f32.mrf.mxu0
    %v550 = vpop.f32.mrf.mxu0
    %v551 = vadd.f32 %v384, %v550
    %v552 = vpop.f32.mrf.mxu0
    %553 = vmatprep.mubr.bf16.mxu0 0
    %554 = vmatmul.mubr.bf16.gmra.mxu0 %v463
    %v555 = vpop.f32.mrf.mxu0
    %v556 = vadd.f32 %v389, %v555
    %v557 = vpop.f32.mrf.mxu0
    %v558 = vpop.f32.mrf.mxu0
    %v559 = vadd.f32 %v392, %v558
    %v560 = vpop.f32.mrf.mxu0
    %561 = vdwg.mxu0
    %v562 = vld [vmem:[%s0] sm:$0xe]
    %v563 = vld [vmem:[%s0 + $0x10] sm:$0xe]
    %v564 = vld [vmem:[%s0 + $0x20] sm:$0xe]
    %v565 = vld [vmem:[%s0 + $0x30] sm:$0xe]
    %v566 = vld [vmem:[%s0 + $0x40] sm:$0xe]
    %v567 = vld [vmem:[%s0 + $0x50] sm:$0xe]
    %v568 = vld [vmem:[%s0 + $0x60] sm:$0xe]
    %v569 = vld [vmem:[%s0 + $0x70] sm:$0xe]
    %vm586 = vcmask 1042432
    %vm587 = vcmask 1046532
    %vm588 = vmor %vm586, %vm587
    %v589 = vrot.slane %v562, 5
    %v590 = vrot.slane %v589, 4
    %v591 = vrot.slane %v20, 5
    %v592 = vsel %vm588, %v590, %v591
    %v593 = vrot.slane %v591, 4
    %v594 = vrot.slane %v37, 5
    %v595 = vsel %vm588, %v593, %v594
    %v596 = vrot.slane %v563, 5
    %v597 = vrot.slane %v596, 4
    %v598 = vrot.slane %v22, 5
    %v599 = vsel %vm588, %v597, %v598
    %v600 = vrot.slane %v598, 4
    %v601 = vrot.slane %v38, 5
    %v602 = vsel %vm588, %v600, %v601
    %v603 = vrot.slane %v564, 5
    %v604 = vrot.slane %v603, 4
    %v605 = vrot.slane %v24, 5
    %v606 = vsel %vm588, %v604, %v605
    %v607 = vrot.slane %v605, 4
    %v608 = vrot.slane %v39, 5
    %v609 = vsel %vm588, %v607, %v608
    %v610 = vrot.slane %v565, 5
    %v611 = vrot.slane %v610, 4
    %v612 = vrot.slane %v26, 5
    %v613 = vsel %vm588, %v611, %v612
    %v614 = vrot.slane %v612, 4
    %v615 = vrot.slane %v40, 5
    %v616 = vsel %vm588, %v614, %v615
    %v617 = vrot.slane %v566, 5
    %v618 = vrot.slane %v617, 4
    %v619 = vrot.slane %v28, 5
    %v620 = vsel %vm588, %v618, %v619
    %v621 = vrot.slane %v619, 4
    %v622 = vrot.slane %v41, 5
    %v623 = vsel %vm588, %v621, %v622
    %v624 = vrot.slane %v567, 5
    %v625 = vrot.slane %v624, 4
    %v626 = vrot.slane %v30, 5
    %v627 = vsel %vm588, %v625, %v626
    %v628 = vrot.slane %v626, 4
    %v629 = vrot.slane %v42, 5
    %v630 = vsel %vm588, %v628, %v629
    %v631 = vrot.slane %v568, 5
    %v632 = vrot.slane %v631, 4
    %v633 = vrot.slane %v32, 5
    %v634 = vsel %vm588, %v632, %v633
    %v635 = vrot.slane %v633, 4
    %v636 = vrot.slane %v43, 5
    %v637 = vsel %vm588, %v635, %v636
    %v638 = vrot.slane %v569, 5
    %v639 = vrot.slane %v638, 4
    %v640 = vrot.slane %v34, 5
    %v641 = vsel %vm588, %v639, %v640
    %v642 = vrot.slane %v640, 4
    %v643 = vrot.slane %v44, 5
    %v644 = vsel %vm588, %v642, %v643
    %s645 = scalar_lea.vmem %s2, 16
    %v646 = vld [vmem:[%s645] sm:$0xf]
    %v647 = vld [vmem:[%s645 + $0x4] sm:$0xf]
    %v648 = vunpack.c.l.b16 %v592
    %v649 = vunpack.c.l.b16 %v595
    %v650 = vunpack.c.l.b16 %v599
    %v651 = vunpack.c.l.b16 %v602
    %v652 = vunpack.c.l.b16 %v606
    %v653 = vunpack.c.l.b16 %v609
    %v654 = vunpack.c.l.b16 %v613
    %v655 = vunpack.c.l.b16 %v616
    %v656 = vunpack.c.l.b16 %v620
    %v657 = vunpack.c.l.b16 %v623
    %v658 = vunpack.c.l.b16 %v627
    %v659 = vunpack.c.l.b16 %v630
    %v660 = vunpack.c.l.b16 %v634
    %v661 = vunpack.c.l.b16 %v637
    %v662 = vunpack.c.l.b16 %v641
    %v663 = vunpack.c.l.b16 %v644
    %v664 = vpack.c.b16 %v649, %v648
    %v665 = vpack.c.b16 %v651, %v650
    %v666 = vpack.c.b16 %v653, %v652
    %v667 = vpack.c.b16 %v655, %v654
    %v668 = vpack.c.b16 %v657, %v656
    %v669 = vpack.c.b16 %v659, %v658
    %v670 = vpack.c.b16 %v661, %v660
    %v671 = vpack.c.b16 %v663, %v662
    %v674 = vunpack.c.l.b16 %v646
    %v675 = vunpack.c.l.b16 %v647
    %v676 = vpack.c.b16 %v675, %v674
    %v679 = vsel %vm273, %v664, 0
    %v682 = vsel %vm273, %v665, 0
    %v685 = vsel %vm273, %v666, 0
    %v688 = vsel %vm273, %v667, 0
    %v691 = vsel %vm273, %v668, 0
    %v694 = vsel %vm273, %v669, 0
    %v697 = vsel %vm273, %v670, 0
    %v700 = vsel %vm273, %v671, 0
    %702 = vmatprep.subr.bf16.mxu0 0
    %703 = vmatpush1.bf16.msra.mxu0 0
    %704 = vmatprep.subr.bf16.mxu0 0
    %705 = vmatpush1.bf16.msra.mxu0 0
    %706 = vmatprep.subr.bf16.mxu0 0
    %707 = vmatpush1.bf16.msra.mxu0 0
    %708 = vmatprep.subr.bf16.mxu0 0
    %709 = vmatpush1.bf16.msra.mxu0 0
    %710 = vmatprep.subr.bf16.mxu0 0
    %711 = vmatpush1.bf16.msra.mxu0 0
    %712 = vmatprep.subr.bf16.mxu0 0
    %713 = vmatpush1.bf16.msra.mxu0 0
    %714 = vmatprep.subr.bf16.mxu0 0
    %715 = vmatpush1.bf16.msra.mxu0 0
    %716 = vmatprep.subr.bf16.mxu0 0
    %717 = vmatpush1.bf16.msra.mxu0 %v676
    %718 = vmatprep.subr.bf16.mxu0 0
    %719 = vmatpush2.bf16.msra.mxu0 0
    %720 = vmatprep.subr.bf16.mxu0 0
    %721 = vmatpush2.bf16.msra.mxu0 0
    %722 = vmatprep.subr.bf16.mxu0 0
    %723 = vmatpush2.bf16.msra.mxu0 0
    %724 = vmatprep.subr.bf16.mxu0 0
    %725 = vmatpush2.bf16.msra.mxu0 0
    %726 = vmatprep.subr.bf16.mxu0 0
    %727 = vmatpush2.bf16.msra.mxu0 0
    %728 = vmatprep.subr.bf16.mxu0 0
    %729 = vmatpush2.bf16.msra.mxu0 0
    %730 = vmatprep.subr.bf16.mxu0 0
    %731 = vmatpush2.bf16.msra.mxu0 0
    %732 = vmatprep.subr.bf16.mxu0 0
    %733 = vmatpush2.bf16.msra.mxu0 0
    %734 = vmatprep.mubr.bf16.mxu0 0
    %735 = vmatmul.mubr.bf16.gmra.mxu0 %v679
    %v736 = vpop.f32.mrf.mxu0
    %v737 = vadd.f32 0.0, %v736
    %v738 = vpop.f32.mrf.mxu0
    %v739 = vpop.f32.mrf.mxu0
    %v740 = vadd.f32 0.0, %v739
    %v741 = vpop.f32.mrf.mxu0
    %742 = vmatprep.mubr.bf16.mxu0 0
    %743 = vmatmul.mubr.bf16.gmra.mxu0 %v682
    %v744 = vpop.f32.mrf.mxu0
    %v745 = vadd.f32 0.0, %v744
    %v746 = vpop.f32.mrf.mxu0
    %v747 = vpop.f32.mrf.mxu0
    %v748 = vadd.f32 0.0, %v747
    %v749 = vpop.f32.mrf.mxu0
    %750 = vmatprep.mubr.bf16.mxu0 0
    %751 = vmatmul.mubr.bf16.gmra.mxu0 %v685
    %v752 = vpop.f32.mrf.mxu0
    %v753 = vadd.f32 0.0, %v752
    %v754 = vpop.f32.mrf.mxu0
    %v755 = vpop.f32.mrf.mxu0
    %v756 = vadd.f32 0.0, %v755
    %v757 = vpop.f32.mrf.mxu0
    %758 = vmatprep.mubr.bf16.mxu0 0
    %759 = vmatmul.mubr.bf16.gmra.mxu0 %v688
    %v760 = vpop.f32.mrf.mxu0
    %v761 = vadd.f32 0.0, %v760
    %v762 = vpop.f32.mrf.mxu0
    %v763 = vpop.f32.mrf.mxu0
    %v764 = vadd.f32 0.0, %v763
    %v765 = vpop.f32.mrf.mxu0
    %766 = vmatprep.mubr.bf16.mxu0 0
    %767 = vmatmul.mubr.bf16.gmra.mxu0 %v691
    %v768 = vpop.f32.mrf.mxu0
    %v769 = vadd.f32 0.0, %v768
    %v770 = vpop.f32.mrf.mxu0
    %v771 = vpop.f32.mrf.mxu0
    %v772 = vadd.f32 0.0, %v771
    %v773 = vpop.f32.mrf.mxu0
    %774 = vmatprep.mubr.bf16.mxu0 0
    %775 = vmatmul.mubr.bf16.gmra.mxu0 %v694
    %v776 = vpop.f32.mrf.mxu0
    %v777 = vadd.f32 0.0, %v776
    %v778 = vpop.f32.mrf.mxu0
    %v779 = vpop.f32.mrf.mxu0
    %v780 = vadd.f32 0.0, %v779
    %v781 = vpop.f32.mrf.mxu0
    %782 = vmatprep.mubr.bf16.mxu0 0
    %783 = vmatmul.mubr.bf16.gmra.mxu0 %v697
    %v784 = vpop.f32.mrf.mxu0
    %v785 = vadd.f32 0.0, %v784
    %v786 = vpop.f32.mrf.mxu0
    %v787 = vpop.f32.mrf.mxu0
    %v788 = vadd.f32 0.0, %v787
    %v789 = vpop.f32.mrf.mxu0
    %790 = vmatprep.mubr.bf16.mxu0 0
    %791 = vmatmul.mubr.bf16.gmra.mxu0 %v700
    %v792 = vpop.f32.mrf.mxu0
    %v793 = vadd.f32 0.0, %v792
    %v794 = vpop.f32.mrf.mxu0
    %v795 = vpop.f32.mrf.mxu0
    %v796 = vadd.f32 0.0, %v795
    %v797 = vpop.f32.mrf.mxu0
    %798 = vdwg.mxu0
    %v799 = vadd.f32 %v500, %v737
    %v800 = vadd.f32 %v503, %v740
    %v801 = vadd.f32 %v508, %v745
    %v802 = vadd.f32 %v511, %v748
    %v803 = vadd.f32 %v516, %v753
    %v804 = vadd.f32 %v519, %v756
    %v805 = vadd.f32 %v524, %v761
    %v806 = vadd.f32 %v527, %v764
    %v807 = vadd.f32 %v532, %v769
    %v808 = vadd.f32 %v535, %v772
    %v809 = vadd.f32 %v540, %v777
    %v810 = vadd.f32 %v543, %v780
    %v811 = vadd.f32 %v548, %v785
    %v812 = vadd.f32 %v551, %v788
    %v813 = vadd.f32 %v556, %v793
    %v814 = vadd.f32 %v559, %v796
    %v815 = vld [vmem:[%s0 + $0x8] sm:$0x3]
    %v816 = vld [vmem:[%s0 + $0x18] sm:$0x3]
    %v817 = vld [vmem:[%s0 + $0x28] sm:$0x3]
    %v818 = vld [vmem:[%s0 + $0x38] sm:$0x3]
    %v819 = vld [vmem:[%s0 + $0x48] sm:$0x3]
    %v820 = vld [vmem:[%s0 + $0x58] sm:$0x3]
    %v821 = vld [vmem:[%s0 + $0x68] sm:$0x3]
    %v822 = vld [vmem:[%s0 + $0x78] sm:$0x3]
    %vm823 = vsmask.f32 2304
    %vm824 = vsmask.f32 6416
    %vm825 = vmor %vm823, %vm824
    %v827 = vshrl.u32 %v562, 16
    %v829 = vrot.slane %v827, 5
    %v830 = vshll.u32 %v562, 16
    %v832 = vrot.slane %v830, 6
    %v833 = vor.u32 %v829, %v832
    %v834 = vrot.slane %v833, 4
    %v835 = vrot.slane %v62, 5
    %v836 = vrot.slane %v58, 6
    %v837 = vor.u32 %v835, %v836
    %v838 = vsel %vm825, %v834, %v837
    %v839 = vrot.slane %v837, 4
    %v841 = vshrl.u32 %v815, 16
    %v843 = vrot.slane %v841, 5
    %v844 = vshll.u32 %v815, 16
    %v846 = vrot.slane %v844, 6
    %v847 = vor.u32 %v843, %v846
    %v848 = vsel %vm825, %v839, %v847
    %v850 = vshrl.u32 %v563, 16
    %v852 = vrot.slane %v850, 5
    %v853 = vshll.u32 %v563, 16
    %v855 = vrot.slane %v853, 6
    %v856 = vor.u32 %v852, %v855
    %v857 = vrot.slane %v856, 4
    %v858 = vrot.slane %v86, 5
    %v859 = vrot.slane %v82, 6
    %v860 = vor.u32 %v858, %v859
    %v861 = vsel %vm825, %v857, %v860
    %v862 = vrot.slane %v860, 4
    %v864 = vshrl.u32 %v816, 16
    %v866 = vrot.slane %v864, 5
    %v867 = vshll.u32 %v816, 16
    %v869 = vrot.slane %v867, 6
    %v870 = vor.u32 %v866, %v869
    %v871 = vsel %vm825, %v862, %v870
    %v873 = vshrl.u32 %v564, 16
    %v875 = vrot.slane %v873, 5
    %v876 = vshll.u32 %v564, 16
    %v878 = vrot.slane %v876, 6
    %v879 = vor.u32 %v875, %v878
    %v880 = vrot.slane %v879, 4
    %v881 = vrot.slane %v110, 5
    %v882 = vrot.slane %v106, 6
    %v883 = vor.u32 %v881, %v882
    %v884 = vsel %vm825, %v880, %v883
    %v885 = vrot.slane %v883, 4
    %v887 = vshrl.u32 %v817, 16
    %v889 = vrot.slane %v887, 5
    %v890 = vshll.u32 %v817, 16
    %v892 = vrot.slane %v890, 6
    %v893 = vor.u32 %v889, %v892
    %v894 = vsel %vm825, %v885, %v893
    %v896 = vshrl.u32 %v565, 16
    %v898 = vrot.slane %v896, 5
    %v899 = vshll.u32 %v565, 16
    %v901 = vrot.slane %v899, 6
    %v902 = vor.u32 %v898, %v901
    %v903 = vrot.slane %v902, 4
    %v904 = vrot.slane %v134, 5
    %v905 = vrot.slane %v130, 6
    %v906 = vor.u32 %v904, %v905
    %v907 = vsel %vm825, %v903, %v906
    %v908 = vrot.slane %v906, 4
    %v910 = vshrl.u32 %v818, 16
    %v912 = vrot.slane %v910, 5
    %v913 = vshll.u32 %v818, 16
    %v915 = vrot.slane %v913, 6
    %v916 = vor.u32 %v912, %v915
    %v917 = vsel %vm825, %v908, %v916
    %v919 = vshrl.u32 %v566, 16
    %v921 = vrot.slane %v919, 5
    %v922 = vshll.u32 %v566, 16
    %v924 = vrot.slane %v922, 6
    %v925 = vor.u32 %v921, %v924
    %v926 = vrot.slane %v925, 4
    %v927 = vrot.slane %v158, 5
    %v928 = vrot.slane %v154, 6
    %v929 = vor.u32 %v927, %v928
    %v930 = vsel %vm825, %v926, %v929
    %v931 = vrot.slane %v929, 4
    %v933 = vshrl.u32 %v819, 16
    %v935 = vrot.slane %v933, 5
    %v936 = vshll.u32 %v819, 16
    %v938 = vrot.slane %v936, 6
    %v939 = vor.u32 %v935, %v938
    %v940 = vsel %vm825, %v931, %v939
    %v942 = vshrl.u32 %v567, 16
    %v944 = vrot.slane %v942, 5
    %v945 = vshll.u32 %v567, 16
    %v947 = vrot.slane %v945, 6
    %v948 = vor.u32 %v944, %v947
    %v949 = vrot.slane %v948, 4
    %v950 = vrot.slane %v182, 5
    %v951 = vrot.slane %v178, 6
    %v952 = vor.u32 %v950, %v951
    %v953 = vsel %vm825, %v949, %v952
    %v954 = vrot.slane %v952, 4
    %v956 = vshrl.u32 %v820, 16
    %v958 = vrot.slane %v956, 5
    %v959 = vshll.u32 %v820, 16
    %v961 = vrot.slane %v959, 6
    %v962 = vor.u32 %v958, %v961
    %v963 = vsel %vm825, %v954, %v962
    %v965 = vshrl.u32 %v568, 16
    %v967 = vrot.slane %v965, 5
    %v968 = vshll.u32 %v568, 16
    %v970 = vrot.slane %v968, 6
    %v971 = vor.u32 %v967, %v970
    %v972 = vrot.slane %v971, 4
    %v973 = vrot.slane %v206, 5
    %v974 = vrot.slane %v202, 6
    %v975 = vor.u32 %v973, %v974
    %v976 = vsel %vm825, %v972, %v975
    %v977 = vrot.slane %v975, 4
    %v979 = vshrl.u32 %v821, 16
    %v981 = vrot.slane %v979, 5
    %v982 = vshll.u32 %v821, 16
    %v984 = vrot.slane %v982, 6
    %v985 = vor.u32 %v981, %v984
    %v986 = vsel %vm825, %v977, %v985
    %v988 = vshrl.u32 %v569, 16
    %v990 = vrot.slane %v988, 5
    %v991 = vshll.u32 %v569, 16
    %v993 = vrot.slane %v991, 6
    %v994 = vor.u32 %v990, %v993
    %v995 = vrot.slane %v994, 4
    %v996 = vrot.slane %v230, 5
    %v997 = vrot.slane %v226, 6
    %v998 = vor.u32 %v996, %v997
    %v999 = vsel %vm825, %v995, %v998
    %v1000 = vrot.slane %v998, 4
    %v1002 = vshrl.u32 %v822, 16
    %v1004 = vrot.slane %v1002, 5
    %v1005 = vshll.u32 %v822, 16
    %v1007 = vrot.slane %v1005, 6
    %v1008 = vor.u32 %v1004, %v1007
    %v1009 = vsel %vm825, %v1000, %v1008
    %s1010 = scalar_lea.vmem %s2, 24
    %v1011 = vld [vmem:[%s1010] sm:$0xf]
    %v1012 = vld [vmem:[%s1010 + $0x4] sm:$0xf]
    %v1013 = vunpack.c.l.b16 %v838
    %v1014 = vunpack.c.l.b16 %v848
    %v1015 = vunpack.c.l.b16 %v861
    %v1016 = vunpack.c.l.b16 %v871
    %v1017 = vunpack.c.l.b16 %v884
    %v1018 = vunpack.c.l.b16 %v894
    %v1019 = vunpack.c.l.b16 %v907
    %v1020 = vunpack.c.l.b16 %v917
    %v1021 = vunpack.c.l.b16 %v930
    %v1022 = vunpack.c.l.b16 %v940
    %v1023 = vunpack.c.l.b16 %v953
    %v1024 = vunpack.c.l.b16 %v963
    %v1025 = vunpack.c.l.b16 %v976
    %v1026 = vunpack.c.l.b16 %v986
    %v1027 = vunpack.c.l.b16 %v999
    %v1028 = vunpack.c.l.b16 %v1009
    %v1029 = vpack.c.b16 %v1014, %v1013
    %v1030 = vpack.c.b16 %v1016, %v1015
    %v1031 = vpack.c.b16 %v1018, %v1017
    %v1032 = vpack.c.b16 %v1020, %v1019
    %v1033 = vpack.c.b16 %v1022, %v1021
    %v1034 = vpack.c.b16 %v1024, %v1023
    %v1035 = vpack.c.b16 %v1026, %v1025
    %v1036 = vpack.c.b16 %v1028, %v1027
    %v1039 = vunpack.c.l.b16 %v1011
    %v1040 = vunpack.c.l.b16 %v1012
    %v1041 = vpack.c.b16 %v1040, %v1039
    %v1044 = vsel %vm273, %v1029, 0
    %v1047 = vsel %vm273, %v1030, 0
    %v1050 = vsel %vm273, %v1031, 0
    %v1053 = vsel %vm273, %v1032, 0
    %v1056 = vsel %vm273, %v1033, 0
    %v1059 = vsel %vm273, %v1034, 0
    %v1062 = vsel %vm273, %v1035, 0
    %v1065 = vsel %vm273, %v1036, 0
    %1067 = vmatprep.subr.bf16.mxu0 0
    %1068 = vmatpush1.bf16.msra.mxu0 0
    %1069 = vmatprep.subr.bf16.mxu0 0
    %1070 = vmatpush1.bf16.msra.mxu0 0
    %1071 = vmatprep.subr.bf16.mxu0 0
    %1072 = vmatpush1.bf16.msra.mxu0 0
    %1073 = vmatprep.subr.bf16.mxu0 0
    %1074 = vmatpush1.bf16.msra.mxu0 0
    %1075 = vmatprep.subr.bf16.mxu0 0
    %1076 = vmatpush1.bf16.msra.mxu0 0
    %1077 = vmatprep.subr.bf16.mxu0 0
    %1078 = vmatpush1.bf16.msra.mxu0 0
    %1079 = vmatprep.subr.bf16.mxu0 0
    %1080 = vmatpush1.bf16.msra.mxu0 0
    %1081 = vmatprep.subr.bf16.mxu0 0
    %1082 = vmatpush1.bf16.msra.mxu0 %v1041
    %1083 = vmatprep.subr.bf16.mxu0 0
    %1084 = vmatpush2.bf16.msra.mxu0 0
    %1085 = vmatprep.subr.bf16.mxu0 0
    %1086 = vmatpush2.bf16.msra.mxu0 0
    %1087 = vmatprep.subr.bf16.mxu0 0
    %1088 = vmatpush2.bf16.msra.mxu0 0
    %1089 = vmatprep.subr.bf16.mxu0 0
    %1090 = vmatpush2.bf16.msra.mxu0 0
    %1091 = vmatprep.subr.bf16.mxu0 0
    %1092 = vmatpush2.bf16.msra.mxu0 0
    %1093 = vmatprep.subr.bf16.mxu0 0
    %1094 = vmatpush2.bf16.msra.mxu0 0
    %1095 = vmatprep.subr.bf16.mxu0 0
    %1096 = vmatpush2.bf16.msra.mxu0 0
    %1097 = vmatprep.subr.bf16.mxu0 0
    %1098 = vmatpush2.bf16.msra.mxu0 0
    %1099 = vmatprep.mubr.bf16.mxu0 0
    %1100 = vmatmul.mubr.bf16.gmra.mxu0 %v1044
    %v1101 = vpop.f32.mrf.mxu0
    %v1102 = vadd.f32 0.0, %v1101
    %v1103 = vpop.f32.mrf.mxu0
    %v1104 = vpop.f32.mrf.mxu0
    %v1105 = vadd.f32 0.0, %v1104
    %v1106 = vpop.f32.mrf.mxu0
    %1107 = vmatprep.mubr.bf16.mxu0 0
    %1108 = vmatmul.mubr.bf16.gmra.mxu0 %v1047
    %v1109 = vpop.f32.mrf.mxu0
    %v1110 = vadd.f32 0.0, %v1109
    %v1111 = vpop.f32.mrf.mxu0
    %v1112 = vpop.f32.mrf.mxu0
    %v1113 = vadd.f32 0.0, %v1112
    %v1114 = vpop.f32.mrf.mxu0
    %1115 = vmatprep.mubr.bf16.mxu0 0
    %1116 = vmatmul.mubr.bf16.gmra.mxu0 %v1050
    %v1117 = vpop.f32.mrf.mxu0
    %v1118 = vadd.f32 0.0, %v1117
    %v1119 = vpop.f32.mrf.mxu0
    %v1120 = vpop.f32.mrf.mxu0
    %v1121 = vadd.f32 0.0, %v1120
    %v1122 = vpop.f32.mrf.mxu0
    %1123 = vmatprep.mubr.bf16.mxu0 0
    %1124 = vmatmul.mubr.bf16.gmra.mxu0 %v1053
    %v1125 = vpop.f32.mrf.mxu0
    %v1126 = vadd.f32 0.0, %v1125
    %v1127 = vpop.f32.mrf.mxu0
    %v1128 = vpop.f32.mrf.mxu0
    %v1129 = vadd.f32 0.0, %v1128
    %v1130 = vpop.f32.mrf.mxu0
    %1131 = vmatprep.mubr.bf16.mxu0 0
    %1132 = vmatmul.mubr.bf16.gmra.mxu0 %v1056
    %v1133 = vpop.f32.mrf.mxu0
    %v1134 = vadd.f32 0.0, %v1133
    %v1135 = vpop.f32.mrf.mxu0
    %v1136 = vpop.f32.mrf.mxu0
    %v1137 = vadd.f32 0.0, %v1136
    %v1138 = vpop.f32.mrf.mxu0
    %1139 = vmatprep.mubr.bf16.mxu0 0
    %1140 = vmatmul.mubr.bf16.gmra.mxu0 %v1059
    %v1141 = vpop.f32.mrf.mxu0
    %v1142 = vadd.f32 0.0, %v1141
    %v1143 = vpop.f32.mrf.mxu0
    %v1144 = vpop.f32.mrf.mxu0
    %v1145 = vadd.f32 0.0, %v1144
    %v1146 = vpop.f32.mrf.mxu0
    %1147 = vmatprep.mubr.bf16.mxu0 0
    %1148 = vmatmul.mubr.bf16.gmra.mxu0 %v1062
    %v1149 = vpop.f32.mrf.mxu0
    %v1150 = vadd.f32 0.0, %v1149
    %v1151 = vpop.f32.mrf.mxu0
    %v1152 = vpop.f32.mrf.mxu0
    %v1153 = vadd.f32 0.0, %v1152
    %v1154 = vpop.f32.mrf.mxu0
    %1155 = vmatprep.mubr.bf16.mxu0 0
    %1156 = vmatmul.mubr.bf16.gmra.mxu0 %v1065
    %v1157 = vpop.f32.mrf.mxu0
    %v1158 = vadd.f32 0.0, %v1157
    %v1159 = vpop.f32.mrf.mxu0
    %v1160 = vpop.f32.mrf.mxu0
    %v1161 = vadd.f32 0.0, %v1160
    %v1162 = vpop.f32.mrf.mxu0
    %1163 = vdwg.mxu0
    %v1164 = vadd.f32 %v799, %v1102
    %v1165 = vadd.f32 %v800, %v1105
    %v1166 = vadd.f32 %v801, %v1110
    %v1167 = vadd.f32 %v802, %v1113
    %v1168 = vadd.f32 %v803, %v1118
    %v1169 = vadd.f32 %v804, %v1121
    %v1170 = vadd.f32 %v805, %v1126
    %v1171 = vadd.f32 %v806, %v1129
    %v1172 = vadd.f32 %v807, %v1134
    %v1173 = vadd.f32 %v808, %v1137
    %v1174 = vadd.f32 %v809, %v1142
    %v1175 = vadd.f32 %v810, %v1145
    %v1176 = vadd.f32 %v811, %v1150
    %v1177 = vadd.f32 %v812, %v1153
    %v1178 = vadd.f32 %v813, %v1158
    %v1179 = vadd.f32 %v814, %v1161
    %v1180 = vld [vmem:[%s3] sm:$0x1]
    %v1182 = vlaneseq
    %v1183 = vshrl.u32 %v1182, 7
    %v1184 = vsub.s32 0, %v1183
    %v1185 = vrot.slane %v1180, %v1184
    %v1187 = vadd.f32 %v1164, %v1185
    %v1188 = vadd.f32 %v1165, %v1185
    %v1189 = vadd.f32 %v1166, %v1185
    %v1190 = vadd.f32 %v1167, %v1185
    %v1191 = vadd.f32 %v1168, %v1185
    %v1192 = vadd.f32 %v1169, %v1185
    %v1193 = vadd.f32 %v1170, %v1185
    %v1194 = vadd.f32 %v1171, %v1185
    %v1195 = vadd.f32 %v1172, %v1185
    %v1196 = vadd.f32 %v1173, %v1185
    %v1197 = vadd.f32 %v1174, %v1185
    %v1198 = vadd.f32 %v1175, %v1185
    %v1199 = vadd.f32 %v1176, %v1185
    %v1200 = vadd.f32 %v1177, %v1185
    %v1201 = vadd.f32 %v1178, %v1185
    %v1202 = vadd.f32 %v1179, %v1185
    %v1203 = vmax.f32 %v1187, 0.0
    %v1204 = vmax.f32 %v1188, 0.0
    %v1205 = vmax.f32 %v1189, 0.0
    %v1206 = vmax.f32 %v1190, 0.0
    %v1207 = vmax.f32 %v1191, 0.0
    %v1208 = vmax.f32 %v1192, 0.0
    %v1209 = vmax.f32 %v1193, 0.0
    %v1210 = vmax.f32 %v1194, 0.0
    %v1211 = vmax.f32 %v1195, 0.0
    %v1212 = vmax.f32 %v1196, 0.0
    %v1213 = vmax.f32 %v1197, 0.0
    %v1214 = vmax.f32 %v1198, 0.0
    %v1215 = vmax.f32 %v1199, 0.0
    %v1216 = vmax.f32 %v1200, 0.0
    %v1217 = vmax.f32 %v1201, 0.0
    %v1218 = vmax.f32 %v1202, 0.0
    %v1219 = vld [vmem:[%s1] sm:$0xff]
    %v1220 = vld [vmem:[%s1 + $0x8] sm:$0xff]
    %v1221 = vld [vmem:[%s1 + $0x10] sm:$0xff]
    %v1222 = vld [vmem:[%s1 + $0x18] sm:$0xff]
    %v1223 = vld [vmem:[%s1 + $0x20] sm:$0xff]
    %v1224 = vld [vmem:[%s1 + $0x28] sm:$0xff]
    %v1225 = vld [vmem:[%s1 + $0x30] sm:$0xff]
    %v1226 = vld [vmem:[%s1 + $0x38] sm:$0xff]
    %v1227 = vld [vmem:[%s1 + $0x40] sm:$0xff]
    %v1228 = vld [vmem:[%s1 + $0x48] sm:$0xff]
    %v1229 = vld [vmem:[%s1 + $0x50] sm:$0xff]
    %v1230 = vld [vmem:[%s1 + $0x58] sm:$0xff]
    %v1231 = vld [vmem:[%s1 + $0x60] sm:$0xff]
    %v1232 = vld [vmem:[%s1 + $0x68] sm:$0xff]
    %v1233 = vld [vmem:[%s1 + $0x70] sm:$0xff]
    %v1234 = vld [vmem:[%s1 + $0x78] sm:$0xff]
    %1236 = vset.pattern.permute.xlu0 0
    %1237 = vperm.xlu0 %1236, %v1219
    %v1238 = vpop.permute.xlu0 %1237
    %1241 = vset.pattern.permute.xlu0 0
    %1242 = vperm.xlu0 %1241, %v1220
    %v1243 = vpop.permute.xlu0 %1242
    %1246 = vset.pattern.permute.xlu0 0
    %1247 = vperm.xlu0 %1246, %v1221
    %v1248 = vpop.permute.xlu0 %1247
    %1251 = vset.pattern.permute.xlu0 0
    %1252 = vperm.xlu0 %1251, %v1222
    %v1253 = vpop.permute.xlu0 %1252
    %1256 = vset.pattern.permute.xlu0 0
    %1257 = vperm.xlu0 %1256, %v1223
    %v1258 = vpop.permute.xlu0 %1257
    %1261 = vset.pattern.permute.xlu0 0
    %1262 = vperm.xlu0 %1261, %v1224
    %v1263 = vpop.permute.xlu0 %1262
    %1266 = vset.pattern.permute.xlu0 0
    %1267 = vperm.xlu0 %1266, %v1225
    %v1268 = vpop.permute.xlu0 %1267
    %1271 = vset.pattern.permute.xlu0 0
    %1272 = vperm.xlu0 %1271, %v1226
    %v1273 = vpop.permute.xlu0 %1272
    %1276 = vset.pattern.permute.xlu0 0
    %1277 = vperm.xlu0 %1276, %v1227
    %v1278 = vpop.permute.xlu0 %1277
    %1281 = vset.pattern.permute.xlu0 0
    %1282 = vperm.xlu0 %1281, %v1228
    %v1283 = vpop.permute.xlu0 %1282
    %1286 = vset.pattern.permute.xlu0 0
    %1287 = vperm.xlu0 %1286, %v1229
    %v1288 = vpop.permute.xlu0 %1287
    %1291 = vset.pattern.permute.xlu0 0
    %1292 = vperm.xlu0 %1291, %v1230
    %v1293 = vpop.permute.xlu0 %1292
    %1296 = vset.pattern.permute.xlu0 0
    %1297 = vperm.xlu0 %1296, %v1231
    %v1298 = vpop.permute.xlu0 %1297
    %1301 = vset.pattern.permute.xlu0 0
    %1302 = vperm.xlu0 %1301, %v1232
    %v1303 = vpop.permute.xlu0 %1302
    %1306 = vset.pattern.permute.xlu0 0
    %1307 = vperm.xlu0 %1306, %v1233
    %v1308 = vpop.permute.xlu0 %1307
    %1311 = vset.pattern.permute.xlu0 0
    %1312 = vperm.xlu0 %1311, %v1234
    %v1313 = vpop.permute.xlu0 %1312
    %v1315 = vmul.f32 %v1203, %v1238
    %v1316 = vmul.f32 %v1204, %v1243
    %v1317 = vmul.f32 %v1205, %v1248
    %v1318 = vmul.f32 %v1206, %v1253
    %v1319 = vmul.f32 %v1207, %v1258
    %v1320 = vmul.f32 %v1208, %v1263
    %v1321 = vmul.f32 %v1209, %v1268
    %v1322 = vmul.f32 %v1210, %v1273
    %v1323 = vmul.f32 %v1211, %v1278
    %v1324 = vmul.f32 %v1212, %v1283
    %v1325 = vmul.f32 %v1213, %v1288
    %v1326 = vmul.f32 %v1214, %v1293
    %v1327 = vmul.f32 %v1215, %v1298
    %v1328 = vmul.f32 %v1216, %v1303
    %v1329 = vmul.f32 %v1217, %v1308
    %v1330 = vmul.f32 %v1218, %v1313
    %vm1331 = vcmask 261120
    %v1332 = vsel %vm1331, %v1315, -inf
    %v1333 = vsel %vm1331, %v1316, -inf
    %v1334 = vmax.f32 %v1332, %v1333
    %v1335 = vrot.slane %v1334, 4
    %v1336 = vmax.f32 %v1334, %v1335
    %v1337 = vrot.slane %v1336, 2
    %v1338 = vmax.f32 %v1336, %v1337
    %v1339 = vrot.slane %v1338, 1
    %v1340 = vmax.f32 %v1338, %v1339
    %v1341 = vsel %vm1331, %v1317, -inf
    %v1342 = vsel %vm1331, %v1318, -inf
    %v1343 = vmax.f32 %v1341, %v1342
    %v1344 = vrot.slane %v1343, 4
    %v1345 = vmax.f32 %v1343, %v1344
    %v1346 = vrot.slane %v1345, 2
    %v1347 = vmax.f32 %v1345, %v1346
    %v1348 = vrot.slane %v1347, 1
    %v1349 = vmax.f32 %v1347, %v1348
    %v1350 = vsel %vm1331, %v1319, -inf
    %v1351 = vsel %vm1331, %v1320, -inf
    %v1352 = vmax.f32 %v1350, %v1351
    %v1353 = vrot.slane %v1352, 4
    %v1354 = vmax.f32 %v1352, %v1353
    %v1355 = vrot.slane %v1354, 2
    %v1356 = vmax.f32 %v1354, %v1355
    %v1357 = vrot.slane %v1356, 1
    %v1358 = vmax.f32 %v1356, %v1357
    %v1359 = vsel %vm1331, %v1321, -inf
    %v1360 = vsel %vm1331, %v1322, -inf
    %v1361 = vmax.f32 %v1359, %v1360
    %v1362 = vrot.slane %v1361, 4
    %v1363 = vmax.f32 %v1361, %v1362
    %v1364 = vrot.slane %v1363, 2
    %v1365 = vmax.f32 %v1363, %v1364
    %v1366 = vrot.slane %v1365, 1
    %v1367 = vmax.f32 %v1365, %v1366
    %v1368 = vsel %vm1331, %v1323, -inf
    %v1369 = vsel %vm1331, %v1324, -inf
    %v1370 = vmax.f32 %v1368, %v1369
    %v1371 = vrot.slane %v1370, 4
    %v1372 = vmax.f32 %v1370, %v1371
    %v1373 = vrot.slane %v1372, 2
    %v1374 = vmax.f32 %v1372, %v1373
    %v1375 = vrot.slane %v1374, 1
    %v1376 = vmax.f32 %v1374, %v1375
    %v1377 = vsel %vm1331, %v1325, -inf
    %v1378 = vsel %vm1331, %v1326, -inf
    %v1379 = vmax.f32 %v1377, %v1378
    %v1380 = vrot.slane %v1379, 4
    %v1381 = vmax.f32 %v1379, %v1380
    %v1382 = vrot.slane %v1381, 2
    %v1383 = vmax.f32 %v1381, %v1382
    %v1384 = vrot.slane %v1383, 1
    %v1385 = vmax.f32 %v1383, %v1384
    %v1386 = vsel %vm1331, %v1327, -inf
    %v1387 = vsel %vm1331, %v1328, -inf
    %v1388 = vmax.f32 %v1386, %v1387
    %v1389 = vrot.slane %v1388, 4
    %v1390 = vmax.f32 %v1388, %v1389
    %v1391 = vrot.slane %v1390, 2
    %v1392 = vmax.f32 %v1390, %v1391
    %v1393 = vrot.slane %v1392, 1
    %v1394 = vmax.f32 %v1392, %v1393
    %v1395 = vsel %vm1331, %v1329, -inf
    %v1396 = vsel %vm1331, %v1330, -inf
    %v1397 = vmax.f32 %v1395, %v1396
    %v1398 = vrot.slane %v1397, 4
    %v1399 = vmax.f32 %v1397, %v1398
    %v1400 = vrot.slane %v1399, 2
    %v1401 = vmax.f32 %v1399, %v1400
    %v1402 = vrot.slane %v1401, 1
    %v1403 = vmax.f32 %v1401, %v1402
    %vm1412 = vcmask 1041409
    %v1413 = vsel %vm1412, %v1349, %v1340
    %vm1414 = vcmask 1042434
    %v1415 = vsel %vm1414, %v1358, %v1413
    %vm1416 = vcmask 1043459
    %v1417 = vsel %vm1416, %v1367, %v1415
    %vm1418 = vcmask 1044484
    %v1419 = vsel %vm1418, %v1376, %v1417
    %vm1420 = vcmask 1045509
    %v1421 = vsel %vm1420, %v1385, %v1419
    %vm1422 = vcmask 1046534
    %v1423 = vsel %vm1422, %v1394, %v1421
    %vm1424 = vcmask 1047559
    %v1425 = vsel %vm1424, %v1403, %v1423
    %1427 = vst.msk [vmem:[#allocation2] sm:$0xff] %vm1331, %v1425
    // Predicated region
    $region18: #{tpu_custom_call.1} parent=1 // pred_check
      _
    $region19: #{tpu_custom_call.1} parent=1 // pred_check_branch
      %1429 = sbr.rel (0) target = $region21
    $region20: #{tpu_custom_call.1} parent=1 // pred_region
      %s1431 = ssub.s32 128, 128
      %1432 = vsyncadd [#allocation3], %s1431
      %s1434 = sshll.u32 [#allocation2], 4
      %s1435 = int_to_ptr.vmem [resolvable:$true] %s1434
      %1437 = dma.vmem_to_hbm [thread:$0]  %s1435, 128, %s4, [#allocation3]
    $region21: #{tpu_custom_call.1} parent=1 // pred_fallthru
      _
    // Predicated region
    $region22: #{tpu_custom_call.1} parent=1 // pred_check
      _
    $region23: #{tpu_custom_call.1} parent=1 // pred_check_branch
      %1439 = sbr.rel (0) target = $region25
    $region24: #{tpu_custom_call.1} parent=1 // pred_region
      %1440 = dma.done [#allocation3], 128
    $region25: #{tpu_custom_call.1} parent=1 // pred_fallthru
      _
    %1441 = vsyncpa [#allocation3], 1

</llo_original>
